<compile_context>
chip_gen: v6e
topology: v6e:2x2x1
jax: 0.10.0
libtpu: 0.0.40
codegen_flags: <defaults>
</compile_context>

<pallas_src>
import math

import jax
import jax.numpy as jnp
from jax.experimental import pallas as pl
from jax.experimental.pallas import tpu as pltpu

EMBED_DIM = 512        # self.embed_dim (default)
SKETCH_FEAT_DIM = 512  # self.sketch_feat_dim
VISION_FEAT_DIM = 768  # self.vision_feat_dim


def _round_up(x, m):
    return ((x + m - 1) // m) * m


def _device_tuning():
    """(num_tensorcores, batch_tile_cap) for the local TPU generation.

    v7x: 2 TensorCores / chip, 256-wide MXU  -> (2, 256)
    v6e: 1 TensorCore,        256-wide MXU  -> (1, 256)
    v5e: 1 TensorCore,        128-wide MXU  -> (1, 128)
    Falls back to a conservative (1, 128) if the device kind is unknown.
    """
    kind = ""
    try:
        kind = jax.devices()[0].device_kind.lower()
    except Exception:
        pass
    if not kind:
        return 1, 128
    is_v7 = ("v7" in kind) or ("7x" in kind)
    is_v5e = ("v5" in kind) and (("lite" in kind) or ("v5e" in kind))
    num_cores = 2 if is_v7 else 1
    bm_cap = 128 if is_v5e else 256
    return num_cores, bm_cap


def _proj_kernel(sketch_feat_ref, image_feat_ref,
                 sketch_proj_ref, image_proj_ref,
                 sketch_out_ref, image_out_ref):
    # Both projection matmuls on the MXU: bf16 operands, f32 accumulation,
    # lane-dense (bm, tn) output blocks stored in the output dtype.
    sketch_out_ref[...] = jnp.dot(
        sketch_feat_ref[...], sketch_proj_ref[...],
        preferred_element_type=jnp.float32).astype(sketch_out_ref.dtype)
    image_out_ref[...] = jnp.dot(
        image_feat_ref[...], image_proj_ref[...],
        preferred_element_type=jnp.float32).astype(image_out_ref.dtype)


def unified_crossmodal_forward(sketch_feat, image_feat,
                               sketch_projection, image_projection, logit_scale,
                               *, out_dtype=jnp.bfloat16):
    """Pallas equivalent of SketchImageAlignmentModel.forward given encoder features.

    Returns a dict matching the PyTorch module's output keys. Pass
    out_dtype=jnp.float32 if downstream normalization / loss is precision-sensitive.
    """
    B = sketch_feat.shape[0]
    sketch_k = sketch_projection.shape[0]
    vision_k = image_projection.shape[0]
    embed_dim = sketch_projection.shape[1]

    # bf16 compute dtype everywhere; MXU accumulates in f32.
    cdt = jnp.bfloat16
    sketch_feat = sketch_feat.astype(cdt)
    image_feat = image_feat.astype(cdt)
    sketch_projection = sketch_projection.astype(cdt)
    image_projection = image_projection.astype(cdt)

    num_cores, bm_cap = _device_tuning()

    # Pad the batch to a multiple of 16 so bf16 vregs are fully packed and the
    # output stores are full-sublane vst (not masked vst.msk). Trimmed below.
    B_pad = _round_up(B, 16)
    if B_pad != B:
        pad = B_pad - B
        sketch_feat = jnp.pad(sketch_feat, ((0, pad), (0, 0)))
        image_feat = jnp.pad(image_feat, ((0, pad), (0, 0)))

    bm = min(B_pad, bm_cap)
    batch_tiles = pl.cdiv(B_pad, bm)

    # Single N block by default: the weight BlockSpecs then return a constant
    # block index (0, 0) for every grid step, so the whole weight matrices are
    # DMA'd once and reused from VMEM across all batch tiles. Split N only when
    # a single batch tile can't feed v7x's second TensorCore.
    if num_cores > 1 and batch_tiles == 1 and embed_dim % (128 * num_cores) == 0:
        n_tiles = num_cores
    else:
        n_tiles = 1
    tn = embed_dim // n_tiles

    grid = (batch_tiles, n_tiles)

    out_shapes = (
        jax.ShapeDtypeStruct((B_pad, embed_dim), out_dtype),  # sketch_embed
        jax.ShapeDtypeStruct((B_pad, embed_dim), out_dtype),  # image_embed
    )

    in_bytes = jnp.dtype(cdt).itemsize
    out_bytes = jnp.dtype(out_dtype).itemsize
    cost = pl.CostEstimate(
        flops=2 * B_pad * (sketch_k + vision_k) * embed_dim,
        transcendentals=0,
        bytes_accessed=(B_pad * (sketch_k + vision_k) * in_bytes       # features
                        + (sketch_k + vision_k) * embed_dim * in_bytes  # weights
                        + 2 * B_pad * embed_dim * out_bytes),            # outputs
    )

    sketch_embed, image_embed = pl.pallas_call(
        _proj_kernel,
        out_shape=out_shapes,
        grid=grid,
        in_specs=[
            pl.BlockSpec((bm, sketch_k), lambda i, j: (i, 0)),
            pl.BlockSpec((bm, vision_k), lambda i, j: (i, 0)),
            pl.BlockSpec((sketch_k, tn), lambda i, j: (0, j)),
            pl.BlockSpec((vision_k, tn), lambda i, j: (0, j)),
        ],
        out_specs=(
            pl.BlockSpec((bm, tn), lambda i, j: (i, j)),
            pl.BlockSpec((bm, tn), lambda i, j: (i, j)),
        ),
        compiler_params=pltpu.CompilerParams(
            dimension_semantics=("parallel", "parallel")),
        cost_estimate=cost,
    )(sketch_feat, image_feat, sketch_projection, image_projection)

    if B_pad != B:
        sketch_embed = sketch_embed[:B]
        image_embed = image_embed[:B]

    # Scalar transcendental: cheaper as a plain XLA op than (1,1) VMEM plumbing.
    scale = jnp.exp(jnp.asarray(logit_scale, jnp.float32))

    return {
        'logit_scale': scale,
        'sketch_embed': sketch_embed,
        'image_embed': image_embed,
    }


def init_params(key):
    """Deterministic parameter init mirroring _initialize_parameters (ULIP-style).

    Weights are stored in bf16 (the kernel's compute dtype).
    """
    k_sketch, k_image = jax.random.split(key, 2)
    sketch_projection = ((SKETCH_FEAT_DIM ** (-0.5)) * jax.random.normal(
        k_sketch, (SKETCH_FEAT_DIM, EMBED_DIM), dtype=jnp.float32)
    ).astype(jnp.bfloat16)
    image_projection = ((VISION_FEAT_DIM ** (-0.5)) * jax.random.normal(
        k_image, (VISION_FEAT_DIM, EMBED_DIM), dtype=jnp.float32)
    ).astype(jnp.bfloat16)
    logit_scale = jnp.asarray(math.log(1.0 / 0.07), dtype=jnp.float32)
    return sketch_projection, image_projection, logit_scale


if __name__ == "__main__":
    key = jax.random.PRNGKey(0)
    k_params, k_sketch_feat, k_image_feat = jax.random.split(key, 3)

    sketch_projection, image_projection, logit_scale = init_params(k_params)

    # Small batch; feature dims fixed by the module (sketch: 512, vision ViT-B: 768).
    B = 8
    sketch_feat = jax.random.normal(
        k_sketch_feat, (B, SKETCH_FEAT_DIM), jnp.float32).astype(jnp.bfloat16)
    image_feat = jax.random.normal(
        k_image_feat, (B, VISION_FEAT_DIM), jnp.float32).astype(jnp.bfloat16)

    outputs = unified_crossmodal_forward(
        sketch_feat, image_feat, sketch_projection, image_projection, logit_scale)
    jax.block_until_ready(outputs)

    # Reference in plain JAX at matching precision (bf16 operands, f32 accumulation).
    ref_sketch = jnp.dot(sketch_feat, sketch_projection,
                         preferred_element_type=jnp.float32)
    ref_image = jnp.dot(image_feat, image_projection,
                        preferred_element_type=jnp.float32)
    ref_scale = jnp.exp(logit_scale)

    assert outputs['sketch_embed'].shape == (B, EMBED_DIM)
    assert outputs['image_embed'].shape == (B, EMBED_DIM)
    assert outputs['sketch_embed'].dtype == jnp.bfloat16
    assert jnp.allclose(outputs['sketch_embed'].astype(jnp.float32), ref_sketch,
                        atol=2e-2, rtol=2e-2)
    assert jnp.allclose(outputs['image_embed'].astype(jnp.float32), ref_image,
                        atol=2e-2, rtol=2e-2)
    assert jnp.allclose(outputs['logit_scale'], ref_scale, atol=1e-5, rtol=1e-5)

    print("KERNEL_OK")
</pallas_src>

<mosaic_0001>
module attributes {stable_mosaic.version = 11 : i64} {
  func.func @_proj_kernel(%arg0: i32, %arg1: i32, %arg2: memref<16x512xbf16, #tpu.memory_space<vmem>>, %arg3: memref<16x768xbf16, #tpu.memory_space<vmem>>, %arg4: memref<512x512xbf16, #tpu.memory_space<vmem>>, %arg5: memref<768x512xbf16, #tpu.memory_space<vmem>>, %arg6: memref<16x512xbf16, #tpu.memory_space<vmem>>, %arg7: memref<16x512xbf16, #tpu.memory_space<vmem>>) attributes {dimension_semantics = [#tpu.dimension_semantics<parallel>, #tpu.dimension_semantics<parallel>], iteration_bounds = array<i64: 1, 1>, scalar_prefetch = 0 : i64, scratch_operands = 0 : i64, tpu.core_type = #tpu.core_type<tc>, window_params = [{transform_indices = @transform_0, window_bounds = array<i64: 16, 512>}, {transform_indices = @transform_1, window_bounds = array<i64: 16, 768>}, {transform_indices = @transform_2, window_bounds = array<i64: 512, 512>}, {transform_indices = @transform_3, window_bounds = array<i64: 768, 512>}, {transform_indices = @transform_4, window_bounds = array<i64: 16, 512>}, {transform_indices = @transform_5, window_bounds = array<i64: 16, 512>}]} {
    %c0 = arith.constant 0 : index
    %c0_0 = arith.constant 0 : index
    %0 = vector.load %arg2[%c0, %c0_0] : memref<16x512xbf16, #tpu.memory_space<vmem>>, vector<16x512xbf16>
    %c0_1 = arith.constant 0 : index
    %c0_2 = arith.constant 0 : index
    %1 = vector.load %arg4[%c0_1, %c0_2] : memref<512x512xbf16, #tpu.memory_space<vmem>>, vector<512x512xbf16>
    %cst = arith.constant dense<0.000000e+00> : vector<16x512xf32>
    %2 = tpu.matmul %0, %1, %cst {dimension_numbers = #tpu.dot_dimension_numbers<[1], [0], [0], [1], [0, 0, 1, 1], [], []>} : vector<16x512xbf16>, vector<512x512xbf16>, vector<16x512xf32> -> vector<16x512xf32>
    %3 = arith.truncf %2 : vector<16x512xf32> to vector<16x512xbf16>
    %c0_3 = arith.constant 0 : index
    %c0_4 = arith.constant 0 : index
    %4 = vector.load %arg6[%c0_3, %c0_4] : memref<16x512xbf16, #tpu.memory_space<vmem>>, vector<16x512xbf16>
    tpu.vector_store %arg6[%c0_3, %c0_4], %3 {strides = array<i32>} : memref<16x512xbf16, #tpu.memory_space<vmem>>, vector<16x512xbf16>,
    %c0_5 = arith.constant 0 : index
    %c0_6 = arith.constant 0 : index
    %5 = vector.load %arg3[%c0_5, %c0_6] : memref<16x768xbf16, #tpu.memory_space<vmem>>, vector<16x768xbf16>
    %c0_7 = arith.constant 0 : index
    %c0_8 = arith.constant 0 : index
    %6 = vector.load %arg5[%c0_7, %c0_8] : memref<768x512xbf16, #tpu.memory_space<vmem>>, vector<768x512xbf16>
    %cst_9 = arith.constant dense<0.000000e+00> : vector<16x512xf32>
    %7 = tpu.matmul %5, %6, %cst_9 {dimension_numbers = #tpu.dot_dimension_numbers<[1], [0], [0], [1], [0, 0, 1, 1], [], []>} : vector<16x768xbf16>, vector<768x512xbf16>, vector<16x512xf32> -> vector<16x512xf32>
    %8 = arith.truncf %7 : vector<16x512xf32> to vector<16x512xbf16>
    %c0_10 = arith.constant 0 : index
    %c0_11 = arith.constant 0 : index
    %9 = vector.load %arg7[%c0_10, %c0_11] : memref<16x512xbf16, #tpu.memory_space<vmem>>, vector<16x512xbf16>
    tpu.vector_store %arg7[%c0_10, %c0_11], %8 {strides = array<i32>} : memref<16x512xbf16, #tpu.memory_space<vmem>>, vector<16x512xbf16>,
    return
  }
  func.func @transform_0(%arg0: i32, %arg1: i32) -> (i32, i32) {
    %c0_i32 = arith.constant 0 : i32
    %c0_i32_0 = arith.constant 0 : i32
    return %arg0, %c0_i32 : i32, i32
  }
  func.func @transform_1(%arg0: i32, %arg1: i32) -> (i32, i32) {
    %c0_i32 = arith.constant 0 : i32
    %c0_i32_0 = arith.constant 0 : i32
    return %arg0, %c0_i32 : i32, i32
  }
  func.func @transform_2(%arg0: i32, %arg1: i32) -> (i32, i32) {
    %c0_i32 = arith.constant 0 : i32
    %c0_i32_0 = arith.constant 0 : i32
    return %c0_i32, %arg1 : i32, i32
  }
  func.func @transform_3(%arg0: i32, %arg1: i32) -> (i32, i32) {
    %c0_i32 = arith.constant 0 : i32
    %c0_i32_0 = arith.constant 0 : i32
    return %c0_i32, %arg1 : i32, i32
  }
  func.func @transform_4(%arg0: i32, %arg1: i32) -> (i32, i32) {
    %c0_i32 = arith.constant 0 : i32
    return %arg0, %arg1 : i32, i32
  }
  func.func @transform_5(%arg0: i32, %arg1: i32) -> (i32, i32) {
    %c0_i32 = arith.constant 0 : i32
    return %arg0, %arg1 : i32, i32
  }
}

</mosaic_0001>

<llo_original>
// kernel: tpu_custom_call.1
$region0: #{tpu_custom_call.1}
  #allocation0 [shape = 'u32[]', space=smem, size = 0x4, offset = 0x4, fixed_abs, tag = 'smem constant byte address 0x4 - core index']
  #allocation1 [shape = 'u32[144,128]{1,0:T(1,128)}', space=vmem, size = 0x12000, scoped, tag = 'internal scratch']
  %s0 = inlined_call_operand.hbm [shape: bf16[16,512], index: 0, kind: input, shape index: {}]
  %s1 = inlined_call_operand.hbm [shape: bf16[16,768], index: 1, kind: input, shape index: {}]
  %s2 = inlined_call_operand.hbm [shape: bf16[512,512], index: 2, kind: input, shape index: {}]
  %s3 = inlined_call_operand.hbm [shape: bf16[768,512], index: 3, kind: input, shape index: {}]
  %s4 = inlined_call_operand.hbm [shape: bf16[16,512], index: 4, kind: output, shape index: {0}]
  %s5 = inlined_call_operand.hbm [shape: bf16[16,512], index: 5, kind: output, shape index: {1}]
  %6 = xla_tuple %s4, %s5
  %s7 = sld [smem:[#allocation0]]
  $region50: #{tpu_custom_call.1} parent=0
    _
  %s9 = ssub.s32 1, %s7
  %s10 = scalar_select 0, %s9, %s7
  $region1: #{tpu_custom_call.1} parent=0
    #allocation2 [shape = 'u8[16384]{0}', space=vmem, size = 0x4000, scoped, tag = 'input window, operand 0, single buffered']
    #allocation3 [shape = 's32[1]{0}', space=sflag, size = 0x4, scoped, tag = 'scoped memory for tpu_custom_call.1']
    #allocation4 [shape = 's32[1]{0}', space=sflag, size = 0x4, scoped, tag = 'scoped memory for tpu_custom_call.1']
    #allocation5 [shape = 'u8[24576]{0}', space=vmem, size = 0x6000, scoped, tag = 'input window, operand 1, single buffered']
    #allocation6 [shape = 's32[1]{0}', space=sflag, size = 0x4, scoped, tag = 'scoped memory for tpu_custom_call.1']
    #allocation7 [shape = 'u8[524288]{0}', space=vmem, size = 0x80000, scoped, tag = 'input window, operand 2, single buffered']
    #allocation8 [shape = 'u8[786432]{0}', space=vmem, size = 0xc0000, scoped, tag = 'input window, operand 3, single buffered']
    #allocation9 [shape = 's32[1]{0}', space=sflag, size = 0x4, scoped, tag = 'scoped memory for tpu_custom_call.1']
    #allocation10 [shape = 'u8[16384]{0}', space=vmem, size = 0x4000, scoped, tag = 'output window, operand 0, single buffered']
    #allocation11 [shape = 'u8[16384]{0}', space=vmem, size = 0x4000, scoped, tag = 'output window, operand 1, single buffered']
    #allocation12 [shape = 's32[1]{0}', space=sflag, size = 0x4, scoped, tag = 'scoped memory for tpu_custom_call.1']
    %11 = vsyncpa [#allocation3], 0
    %12 = vsyncpa [#allocation6], 0
    %13 = vsyncpa [#allocation9], 0
    %14 = vsyncpa [#allocation4], 0
    %15 = vsyncpa [#allocation12], 0
    // Predicated region
    $region2: #{tpu_custom_call.1} parent=1 // pred_check
      _
    $region3: #{tpu_custom_call.1} parent=1 // pred_check_branch
      %17 = sbr.rel (0) target = $region5
    $region4: #{tpu_custom_call.1} parent=1 // pred_region
      %s19 = ssub.s32 512, 512
      %20 = vsyncadd [#allocation3], %s19
      %s21 = sshll.u32 [#allocation2], 4
      %s22 = int_to_ptr.vmem [resolvable:$true] %s21
      %27 = dma.hbm_to_vmem [thread:$0]  %s0, 512, %s22, [#allocation3], 256, 256, 16
    $region5: #{tpu_custom_call.1} parent=1 // pred_fallthru
      _
    // Predicated region
    $region6: #{tpu_custom_call.1} parent=1 // pred_check
      _
    $region7: #{tpu_custom_call.1} parent=1 // pred_check_branch
      %29 = sbr.rel (0) target = $region9
    $region8: #{tpu_custom_call.1} parent=1 // pred_region
      %s31 = ssub.s32 768, 768
      %32 = vsyncadd [#allocation6], %s31
      %s33 = sshll.u32 [#allocation5], 4
      %s34 = int_to_ptr.vmem [resolvable:$true] %s33
      %39 = dma.hbm_to_vmem [thread:$0]  %s1, 768, %s34, [#allocation6], 384, 384, 24
    $region9: #{tpu_custom_call.1} parent=1 // pred_fallthru
      _
    // Predicated region
    $region10: #{tpu_custom_call.1} parent=1 // pred_check
      _
    $region11: #{tpu_custom_call.1} parent=1 // pred_check_branch
      %41 = sbr.rel (0) target = $region13
    $region12: #{tpu_custom_call.1} parent=1 // pred_region
      %s43 = ssub.s32 16384, 16384
      %44 = vsyncadd [#allocation6], %s43
      %s45 = sshll.u32 [#allocation7], 4
      %s46 = int_to_ptr.vmem [resolvable:$true] %s45
      %51 = dma.hbm_to_vmem [thread:$0]  %s2, 16384, %s46, [#allocation6], 256, 256, 16
    $region13: #{tpu_custom_call.1} parent=1 // pred_fallthru
      _
    // Predicated region
    $region14: #{tpu_custom_call.1} parent=1 // pred_check
      _
    $region15: #{tpu_custom_call.1} parent=1 // pred_check_branch
      %53 = sbr.rel (0) target = $region17
    $region16: #{tpu_custom_call.1} parent=1 // pred_region
      %s55 = ssub.s32 24576, 24576
      %56 = vsyncadd [#allocation9], %s55
      %s57 = sshll.u32 [#allocation8], 4
      %s58 = int_to_ptr.vmem [resolvable:$true] %s57
      %63 = dma.hbm_to_vmem [thread:$0]  %s3, 24576, %s58, [#allocation9], 256, 256, 16
    $region17: #{tpu_custom_call.1} parent=1 // pred_fallthru
      _
    // Predicated region
    $region18: #{tpu_custom_call.1} parent=1 // pred_check
      _
    $region19: #{tpu_custom_call.1} parent=1 // pred_check_branch
      %65 = sbr.rel (0) target = $region21
    $region20: #{tpu_custom_call.1} parent=1 // pred_region
      %66 = dma.done [#allocation3], 512
    $region21: #{tpu_custom_call.1} parent=1 // pred_fallthru
      _
    // Predicated region
    $region22: #{tpu_custom_call.1} parent=1 // pred_check
      _
    $region23: #{tpu_custom_call.1} parent=1 // pred_check_branch
      %68 = sbr.rel (0) target = $region25
    $region24: #{tpu_custom_call.1} parent=1 // pred_region
      %69 = dma.done [#allocation6], 768
    $region25: #{tpu_custom_call.1} parent=1 // pred_fallthru
      _
    // Predicated region
    $region26: #{tpu_custom_call.1} parent=1 // pred_check
      _
    $region27: #{tpu_custom_call.1} parent=1 // pred_check_branch
      %71 = sbr.rel (0) target = $region29
    $region28: #{tpu_custom_call.1} parent=1 // pred_region
      %72 = dma.done [#allocation6], 16384
    $region29: #{tpu_custom_call.1} parent=1 // pred_fallthru
      _
    // Predicated region
    $region30: #{tpu_custom_call.1} parent=1 // pred_check
      _
    $region31: #{tpu_custom_call.1} parent=1 // pred_check_branch
      %74 = sbr.rel (0) target = $region33
    $region32: #{tpu_custom_call.1} parent=1 // pred_region
      %75 = dma.done [#allocation9], 24576
    $region33: #{tpu_custom_call.1} parent=1 // pred_fallthru
      _
    %v76 = vld [vmem:[#allocation2] sm:$0xff]
    %v77 = vld [vmem:[#allocation2 + $0x8] sm:$0xff]
    %v78 = vld [vmem:[#allocation2 + $0x10] sm:$0xff]
    %v79 = vld [vmem:[#allocation2 + $0x18] sm:$0xff]
    %v80 = vld [vmem:[#allocation7] sm:$0xff]
    %v81 = vld [vmem:[#allocation7 + $0x8] sm:$0xff]
    %v82 = vld [vmem:[#allocation7 + $0x10] sm:$0xff]
    %v83 = vld [vmem:[#allocation7 + $0x18] sm:$0xff]
    %v84 = vld [vmem:[#allocation7 + $0x20] sm:$0xff]
    %v85 = vld [vmem:[#allocation7 + $0x28] sm:$0xff]
    %v86 = vld [vmem:[#allocation7 + $0x30] sm:$0xff]
    %v87 = vld [vmem:[#allocation7 + $0x38] sm:$0xff]
    %v88 = vld [vmem:[#allocation7 + $0x40] sm:$0xff]
    %v89 = vld [vmem:[#allocation7 + $0x48] sm:$0xff]
    %v90 = vld [vmem:[#allocation7 + $0x50] sm:$0xff]
    %v91 = vld [vmem:[#allocation7 + $0x58] sm:$0xff]
    %v92 = vld [vmem:[#allocation7 + $0x60] sm:$0xff]
    %v93 = vld [vmem:[#allocation7 + $0x68] sm:$0xff]
    %v94 = vld [vmem:[#allocation7 + $0x70] sm:$0xff]
    %v95 = vld [vmem:[#allocation7 + $0x78] sm:$0xff]
    %v96 = vld [vmem:[#allocation7 + $0x80] sm:$0xff]
    %v97 = vld [vmem:[#allocation7 + $0x88] sm:$0xff]
    %v98 = vld [vmem:[#allocation7 + $0x90] sm:$0xff]
    %v99 = vld [vmem:[#allocation7 + $0x98] sm:$0xff]
    %v100 = vld [vmem:[#allocation7 + $0xa0] sm:$0xff]
    %v101 = vld [vmem:[#allocation7 + $0xa8] sm:$0xff]
    %v102 = vld [vmem:[#allocation7 + $0xb0] sm:$0xff]
    %v103 = vld [vmem:[#allocation7 + $0xb8] sm:$0xff]
    %v104 = vld [vmem:[#allocation7 + $0xc0] sm:$0xff]
    %v105 = vld [vmem:[#allocation7 + $0xc8] sm:$0xff]
    %v106 = vld [vmem:[#allocation7 + $0xd0] sm:$0xff]
    %v107 = vld [vmem:[#allocation7 + $0xd8] sm:$0xff]
    %v108 = vld [vmem:[#allocation7 + $0xe0] sm:$0xff]
    %v109 = vld [vmem:[#allocation7 + $0xe8] sm:$0xff]
    %v110 = vld [vmem:[#allocation7 + $0xf0] sm:$0xff]
    %v111 = vld [vmem:[#allocation7 + $0xf8] sm:$0xff]
    %v112 = vld [vmem:[#allocation7 + $0x100] sm:$0xff]
    %v113 = vld [vmem:[#allocation7 + $0x108] sm:$0xff]
    %v114 = vld [vmem:[#allocation7 + $0x110] sm:$0xff]
    %v115 = vld [vmem:[#allocation7 + $0x118] sm:$0xff]
    %v116 = vld [vmem:[#allocation7 + $0x120] sm:$0xff]
    %v117 = vld [vmem:[#allocation7 + $0x128] sm:$0xff]
    %v118 = vld [vmem:[#allocation7 + $0x130] sm:$0xff]
    %v119 = vld [vmem:[#allocation7 + $0x138] sm:$0xff]
    %v120 = vld [vmem:[#allocation7 + $0x140] sm:$0xff]
    %v121 = vld [vmem:[#allocation7 + $0x148] sm:$0xff]
    %v122 = vld [vmem:[#allocation7 + $0x150] sm:$0xff]
    %v123 = vld [vmem:[#allocation7 + $0x158] sm:$0xff]
    %v124 = vld [vmem:[#allocation7 + $0x160] sm:$0xff]
    %v125 = vld [vmem:[#allocation7 + $0x168] sm:$0xff]
    %v126 = vld [vmem:[#allocation7 + $0x170] sm:$0xff]
    %v127 = vld [vmem:[#allocation7 + $0x178] sm:$0xff]
    %v128 = vld [vmem:[#allocation7 + $0x180] sm:$0xff]
    %v129 = vld [vmem:[#allocation7 + $0x188] sm:$0xff]
    %v130 = vld [vmem:[#allocation7 + $0x190] sm:$0xff]
    %v131 = vld [vmem:[#allocation7 + $0x198] sm:$0xff]
    %v132 = vld [vmem:[#allocation7 + $0x1a0] sm:$0xff]
    %v133 = vld [vmem:[#allocation7 + $0x1a8] sm:$0xff]
    %v134 = vld [vmem:[#allocation7 + $0x1b0] sm:$0xff]
    %v135 = vld [vmem:[#allocation7 + $0x1b8] sm:$0xff]
    %v136 = vld [vmem:[#allocation7 + $0x1c0] sm:$0xff]
    %v137 = vld [vmem:[#allocation7 + $0x1c8] sm:$0xff]
    %v138 = vld [vmem:[#allocation7 + $0x1d0] sm:$0xff]
    %v139 = vld [vmem:[#allocation7 + $0x1d8] sm:$0xff]
    %v140 = vld [vmem:[#allocation7 + $0x1e0] sm:$0xff]
    %v141 = vld [vmem:[#allocation7 + $0x1e8] sm:$0xff]
    %v142 = vld [vmem:[#allocation7 + $0x1f0] sm:$0xff]
    %v143 = vld [vmem:[#allocation7 + $0x1f8] sm:$0xff]
    %v144 = vld [vmem:[#allocation7 + $0x200] sm:$0xff]
    %v145 = vld [vmem:[#allocation7 + $0x208] sm:$0xff]
    %v146 = vld [vmem:[#allocation7 + $0x210] sm:$0xff]
    %v147 = vld [vmem:[#allocation7 + $0x218] sm:$0xff]
    %v148 = vld [vmem:[#allocation7 + $0x220] sm:$0xff]
    %v149 = vld [vmem:[#allocation7 + $0x228] sm:$0xff]
    %v150 = vld [vmem:[#allocation7 + $0x230] sm:$0xff]
    %v151 = vld [vmem:[#allocation7 + $0x238] sm:$0xff]
    %v152 = vld [vmem:[#allocation7 + $0x240] sm:$0xff]
    %v153 = vld [vmem:[#allocation7 + $0x248] sm:$0xff]
    %v154 = vld [vmem:[#allocation7 + $0x250] sm:$0xff]
    %v155 = vld [vmem:[#allocation7 + $0x258] sm:$0xff]
    %v156 = vld [vmem:[#allocation7 + $0x260] sm:$0xff]
    %v157 = vld [vmem:[#allocation7 + $0x268] sm:$0xff]
    %v158 = vld [vmem:[#allocation7 + $0x270] sm:$0xff]
    %v159 = vld [vmem:[#allocation7 + $0x278] sm:$0xff]
    %v160 = vld [vmem:[#allocation7 + $0x280] sm:$0xff]
    %v161 = vld [vmem:[#allocation7 + $0x288] sm:$0xff]
    %v162 = vld [vmem:[#allocation7 + $0x290] sm:$0xff]
    %v163 = vld [vmem:[#allocation7 + $0x298] sm:$0xff]
    %v164 = vld [vmem:[#allocation7 + $0x2a0] sm:$0xff]
    %v165 = vld [vmem:[#allocation7 + $0x2a8] sm:$0xff]
    %v166 = vld [vmem:[#allocation7 + $0x2b0] sm:$0xff]
    %v167 = vld [vmem:[#allocation7 + $0x2b8] sm:$0xff]
    %v168 = vld [vmem:[#allocation7 + $0x2c0] sm:$0xff]
    %v169 = vld [vmem:[#allocation7 + $0x2c8] sm:$0xff]
    %v170 = vld [vmem:[#allocation7 + $0x2d0] sm:$0xff]
    %v171 = vld [vmem:[#allocation7 + $0x2d8] sm:$0xff]
    %v172 = vld [vmem:[#allocation7 + $0x2e0] sm:$0xff]
    %v173 = vld [vmem:[#allocation7 + $0x2e8] sm:$0xff]
    %v174 = vld [vmem:[#allocation7 + $0x2f0] sm:$0xff]
    %v175 = vld [vmem:[#allocation7 + $0x2f8] sm:$0xff]
    %v176 = vld [vmem:[#allocation7 + $0x300] sm:$0xff]
    %v177 = vld [vmem:[#allocation7 + $0x308] sm:$0xff]
    %v178 = vld [vmem:[#allocation7 + $0x310] sm:$0xff]
    %v179 = vld [vmem:[#allocation7 + $0x318] sm:$0xff]
    %v180 = vld [vmem:[#allocation7 + $0x320] sm:$0xff]
    %v181 = vld [vmem:[#allocation7 + $0x328] sm:$0xff]
    %v182 = vld [vmem:[#allocation7 + $0x330] sm:$0xff]
    %v183 = vld [vmem:[#allocation7 + $0x338] sm:$0xff]
    %v184 = vld [vmem:[#allocation7 + $0x340] sm:$0xff]
    %v185 = vld [vmem:[#allocation7 + $0x348] sm:$0xff]
    %v186 = vld [vmem:[#allocation7 + $0x350] sm:$0xff]
    %v187 = vld [vmem:[#allocation7 + $0x358] sm:$0xff]
    %v188 = vld [vmem:[#allocation7 + $0x360] sm:$0xff]
    %v189 = vld [vmem:[#allocation7 + $0x368] sm:$0xff]
    %v190 = vld [vmem:[#allocation7 + $0x370] sm:$0xff]
    %v191 = vld [vmem:[#allocation7 + $0x378] sm:$0xff]
    %v192 = vld [vmem:[#allocation7 + $0x380] sm:$0xff]
    %v193 = vld [vmem:[#allocation7 + $0x388] sm:$0xff]
    %v194 = vld [vmem:[#allocation7 + $0x390] sm:$0xff]
    %v195 = vld [vmem:[#allocation7 + $0x398] sm:$0xff]
    %v196 = vld [vmem:[#allocation7 + $0x3a0] sm:$0xff]
    %v197 = vld [vmem:[#allocation7 + $0x3a8] sm:$0xff]
    %v198 = vld [vmem:[#allocation7 + $0x3b0] sm:$0xff]
    %v199 = vld [vmem:[#allocation7 + $0x3b8] sm:$0xff]
    %v200 = vld [vmem:[#allocation7 + $0x3c0] sm:$0xff]
    %v201 = vld [vmem:[#allocation7 + $0x3c8] sm:$0xff]
    %v202 = vld [vmem:[#allocation7 + $0x3d0] sm:$0xff]
    %v203 = vld [vmem:[#allocation7 + $0x3d8] sm:$0xff]
    %v204 = vld [vmem:[#allocation7 + $0x3e0] sm:$0xff]
    %v205 = vld [vmem:[#allocation7 + $0x3e8] sm:$0xff]
    %v206 = vld [vmem:[#allocation7 + $0x3f0] sm:$0xff]
    %v207 = vld [vmem:[#allocation7 + $0x3f8] sm:$0xff]
    %v212 = vunpack.c.l.b16 %v76
    %v213 = vunpack.c.h.b16 %v76
    %v214 = vunpack.c.l.b16 %v77
    %v215 = vunpack.c.h.b16 %v77
    %v216 = vunpack.c.l.b16 %v78
    %v217 = vunpack.c.h.b16 %v78
    %v218 = vunpack.c.l.b16 %v79
    %v219 = vunpack.c.h.b16 %v79
    %v220 = vpack.c.b16 %v216, %v212
    %v221 = vpack.c.b16 %v217, %v213
    %v222 = vpack.c.b16 %v218, %v214
    %v223 = vpack.c.b16 %v219, %v215
    %v356 = vunpack.c.l.b16 %v80
    %v357 = vunpack.c.h.b16 %v80
    %v358 = vunpack.c.l.b16 %v81
    %v359 = vunpack.c.h.b16 %v81
    %v360 = vunpack.c.l.b16 %v82
    %v361 = vunpack.c.h.b16 %v82
    %v362 = vunpack.c.l.b16 %v83
    %v363 = vunpack.c.h.b16 %v83
    %v364 = vunpack.c.l.b16 %v84
    %v365 = vunpack.c.h.b16 %v84
    %v366 = vunpack.c.l.b16 %v85
    %v367 = vunpack.c.h.b16 %v85
    %v368 = vunpack.c.l.b16 %v86
    %v369 = vunpack.c.h.b16 %v86
    %v370 = vunpack.c.l.b16 %v87
    %v371 = vunpack.c.h.b16 %v87
    %v372 = vunpack.c.l.b16 %v88
    %v373 = vunpack.c.h.b16 %v88
    %v374 = vunpack.c.l.b16 %v89
    %v375 = vunpack.c.h.b16 %v89
    %v376 = vunpack.c.l.b16 %v90
    %v377 = vunpack.c.h.b16 %v90
    %v378 = vunpack.c.l.b16 %v91
    %v379 = vunpack.c.h.b16 %v91
    %v380 = vunpack.c.l.b16 %v92
    %v381 = vunpack.c.h.b16 %v92
    %v382 = vunpack.c.l.b16 %v93
    %v383 = vunpack.c.h.b16 %v93
    %v384 = vunpack.c.l.b16 %v94
    %v385 = vunpack.c.h.b16 %v94
    %v386 = vunpack.c.l.b16 %v95
    %v387 = vunpack.c.h.b16 %v95
    %v388 = vunpack.c.l.b16 %v96
    %v389 = vunpack.c.h.b16 %v96
    %v390 = vunpack.c.l.b16 %v97
    %v391 = vunpack.c.h.b16 %v97
    %v392 = vunpack.c.l.b16 %v98
    %v393 = vunpack.c.h.b16 %v98
    %v394 = vunpack.c.l.b16 %v99
    %v395 = vunpack.c.h.b16 %v99
    %v396 = vunpack.c.l.b16 %v100
    %v397 = vunpack.c.h.b16 %v100
    %v398 = vunpack.c.l.b16 %v101
    %v399 = vunpack.c.h.b16 %v101
    %v400 = vunpack.c.l.b16 %v102
    %v401 = vunpack.c.h.b16 %v102
    %v402 = vunpack.c.l.b16 %v103
    %v403 = vunpack.c.h.b16 %v103
    %v404 = vunpack.c.l.b16 %v104
    %v405 = vunpack.c.h.b16 %v104
    %v406 = vunpack.c.l.b16 %v105
    %v407 = vunpack.c.h.b16 %v105
    %v408 = vunpack.c.l.b16 %v106
    %v409 = vunpack.c.h.b16 %v106
    %v410 = vunpack.c.l.b16 %v107
    %v411 = vunpack.c.h.b16 %v107
    %v412 = vunpack.c.l.b16 %v108
    %v413 = vunpack.c.h.b16 %v108
    %v414 = vunpack.c.l.b16 %v109
    %v415 = vunpack.c.h.b16 %v109
    %v416 = vunpack.c.l.b16 %v110
    %v417 = vunpack.c.h.b16 %v110
    %v418 = vunpack.c.l.b16 %v111
    %v419 = vunpack.c.h.b16 %v111
    %v420 = vunpack.c.l.b16 %v112
    %v421 = vunpack.c.h.b16 %v112
    %v422 = vunpack.c.l.b16 %v113
    %v423 = vunpack.c.h.b16 %v113
    %v424 = vunpack.c.l.b16 %v114
    %v425 = vunpack.c.h.b16 %v114
    %v426 = vunpack.c.l.b16 %v115
    %v427 = vunpack.c.h.b16 %v115
    %v428 = vunpack.c.l.b16 %v116
    %v429 = vunpack.c.h.b16 %v116
    %v430 = vunpack.c.l.b16 %v117
    %v431 = vunpack.c.h.b16 %v117
    %v432 = vunpack.c.l.b16 %v118
    %v433 = vunpack.c.h.b16 %v118
    %v434 = vunpack.c.l.b16 %v119
    %v435 = vunpack.c.h.b16 %v119
    %v436 = vunpack.c.l.b16 %v120
    %v437 = vunpack.c.h.b16 %v120
    %v438 = vunpack.c.l.b16 %v121
    %v439 = vunpack.c.h.b16 %v121
    %v440 = vunpack.c.l.b16 %v122
    %v441 = vunpack.c.h.b16 %v122
    %v442 = vunpack.c.l.b16 %v123
    %v443 = vunpack.c.h.b16 %v123
    %v444 = vunpack.c.l.b16 %v124
    %v445 = vunpack.c.h.b16 %v124
    %v446 = vunpack.c.l.b16 %v125
    %v447 = vunpack.c.h.b16 %v125
    %v448 = vunpack.c.l.b16 %v126
    %v449 = vunpack.c.h.b16 %v126
    %v450 = vunpack.c.l.b16 %v127
    %v451 = vunpack.c.h.b16 %v127
    %v452 = vunpack.c.l.b16 %v128
    %v453 = vunpack.c.h.b16 %v128
    %v454 = vunpack.c.l.b16 %v129
    %v455 = vunpack.c.h.b16 %v129
    %v456 = vunpack.c.l.b16 %v130
    %v457 = vunpack.c.h.b16 %v130
    %v458 = vunpack.c.l.b16 %v131
    %v459 = vunpack.c.h.b16 %v131
    %v460 = vunpack.c.l.b16 %v132
    %v461 = vunpack.c.h.b16 %v132
    %v462 = vunpack.c.l.b16 %v133
    %v463 = vunpack.c.h.b16 %v133
    %v464 = vunpack.c.l.b16 %v134
    %v465 = vunpack.c.h.b16 %v134
    %v466 = vunpack.c.l.b16 %v135
    %v467 = vunpack.c.h.b16 %v135
    %v468 = vunpack.c.l.b16 %v136
    %v469 = vunpack.c.h.b16 %v136
    %v470 = vunpack.c.l.b16 %v137
    %v471 = vunpack.c.h.b16 %v137
    %v472 = vunpack.c.l.b16 %v138
    %v473 = vunpack.c.h.b16 %v138
    %v474 = vunpack.c.l.b16 %v139
    %v475 = vunpack.c.h.b16 %v139
    %v476 = vunpack.c.l.b16 %v140
    %v477 = vunpack.c.h.b16 %v140
    %v478 = vunpack.c.l.b16 %v141
    %v479 = vunpack.c.h.b16 %v141
    %v480 = vunpack.c.l.b16 %v142
    %v481 = vunpack.c.h.b16 %v142
    %v482 = vunpack.c.l.b16 %v143
    %v483 = vunpack.c.h.b16 %v143
    %v484 = vunpack.c.l.b16 %v144
    %v485 = vunpack.c.h.b16 %v144
    %v486 = vunpack.c.l.b16 %v145
    %v487 = vunpack.c.h.b16 %v145
    %v488 = vunpack.c.l.b16 %v146
    %v489 = vunpack.c.h.b16 %v146
    %v490 = vunpack.c.l.b16 %v147
    %v491 = vunpack.c.h.b16 %v147
    %v492 = vunpack.c.l.b16 %v148
    %v493 = vunpack.c.h.b16 %v148
    %v494 = vunpack.c.l.b16 %v149
    %v495 = vunpack.c.h.b16 %v149
    %v496 = vunpack.c.l.b16 %v150
    %v497 = vunpack.c.h.b16 %v150
    %v498 = vunpack.c.l.b16 %v151
    %v499 = vunpack.c.h.b16 %v151
    %v500 = vunpack.c.l.b16 %v152
    %v501 = vunpack.c.h.b16 %v152
    %v502 = vunpack.c.l.b16 %v153
    %v503 = vunpack.c.h.b16 %v153
    %v504 = vunpack.c.l.b16 %v154
    %v505 = vunpack.c.h.b16 %v154
    %v506 = vunpack.c.l.b16 %v155
    %v507 = vunpack.c.h.b16 %v155
    %v508 = vunpack.c.l.b16 %v156
    %v509 = vunpack.c.h.b16 %v156
    %v510 = vunpack.c.l.b16 %v157
    %v511 = vunpack.c.h.b16 %v157
    %v512 = vunpack.c.l.b16 %v158
    %v513 = vunpack.c.h.b16 %v158
    %v514 = vunpack.c.l.b16 %v159
    %v515 = vunpack.c.h.b16 %v159
    %v516 = vunpack.c.l.b16 %v160
    %v517 = vunpack.c.h.b16 %v160
    %v518 = vunpack.c.l.b16 %v161
    %v519 = vunpack.c.h.b16 %v161
    %v520 = vunpack.c.l.b16 %v162
    %v521 = vunpack.c.h.b16 %v162
    %v522 = vunpack.c.l.b16 %v163
    %v523 = vunpack.c.h.b16 %v163
    %v524 = vunpack.c.l.b16 %v164
    %v525 = vunpack.c.h.b16 %v164
    %v526 = vunpack.c.l.b16 %v165
    %v527 = vunpack.c.h.b16 %v165
    %v528 = vunpack.c.l.b16 %v166
    %v529 = vunpack.c.h.b16 %v166
    %v530 = vunpack.c.l.b16 %v167
    %v531 = vunpack.c.h.b16 %v167
    %v532 = vunpack.c.l.b16 %v168
    %v533 = vunpack.c.h.b16 %v168
    %v534 = vunpack.c.l.b16 %v169
    %v535 = vunpack.c.h.b16 %v169
    %v536 = vunpack.c.l.b16 %v170
    %v537 = vunpack.c.h.b16 %v170
    %v538 = vunpack.c.l.b16 %v171
    %v539 = vunpack.c.h.b16 %v171
    %v540 = vunpack.c.l.b16 %v172
    %v541 = vunpack.c.h.b16 %v172
    %v542 = vunpack.c.l.b16 %v173
    %v543 = vunpack.c.h.b16 %v173
    %v544 = vunpack.c.l.b16 %v174
    %v545 = vunpack.c.h.b16 %v174
    %v546 = vunpack.c.l.b16 %v175
    %v547 = vunpack.c.h.b16 %v175
    %v548 = vunpack.c.l.b16 %v176
    %v549 = vunpack.c.h.b16 %v176
    %v550 = vunpack.c.l.b16 %v177
    %v551 = vunpack.c.h.b16 %v177
    %v552 = vunpack.c.l.b16 %v178
    %v553 = vunpack.c.h.b16 %v178
    %v554 = vunpack.c.l.b16 %v179
    %v555 = vunpack.c.h.b16 %v179
    %v556 = vunpack.c.l.b16 %v180
    %v557 = vunpack.c.h.b16 %v180
    %v558 = vunpack.c.l.b16 %v181
    %v559 = vunpack.c.h.b16 %v181
    %v560 = vunpack.c.l.b16 %v182
    %v561 = vunpack.c.h.b16 %v182
    %v562 = vunpack.c.l.b16 %v183
    %v563 = vunpack.c.h.b16 %v183
    %v564 = vunpack.c.l.b16 %v184
    %v565 = vunpack.c.h.b16 %v184
    %v566 = vunpack.c.l.b16 %v185
    %v567 = vunpack.c.h.b16 %v185
    %v568 = vunpack.c.l.b16 %v186
    %v569 = vunpack.c.h.b16 %v186
    %v570 = vunpack.c.l.b16 %v187
    %v571 = vunpack.c.h.b16 %v187
    %v572 = vunpack.c.l.b16 %v188
    %v573 = vunpack.c.h.b16 %v188
    %v574 = vunpack.c.l.b16 %v189
    %v575 = vunpack.c.h.b16 %v189
    %v576 = vunpack.c.l.b16 %v190
    %v577 = vunpack.c.h.b16 %v190
    %v578 = vunpack.c.l.b16 %v191
    %v579 = vunpack.c.h.b16 %v191
    %v580 = vunpack.c.l.b16 %v192
    %v581 = vunpack.c.h.b16 %v192
    %v582 = vunpack.c.l.b16 %v193
    %v583 = vunpack.c.h.b16 %v193
    %v584 = vunpack.c.l.b16 %v194
    %v585 = vunpack.c.h.b16 %v194
    %v586 = vunpack.c.l.b16 %v195
    %v587 = vunpack.c.h.b16 %v195
    %v588 = vunpack.c.l.b16 %v196
    %v589 = vunpack.c.h.b16 %v196
    %v590 = vunpack.c.l.b16 %v197
    %v591 = vunpack.c.h.b16 %v197
    %v592 = vunpack.c.l.b16 %v198
    %v593 = vunpack.c.h.b16 %v198
    %v594 = vunpack.c.l.b16 %v199
    %v595 = vunpack.c.h.b16 %v199
    %v596 = vunpack.c.l.b16 %v200
    %v597 = vunpack.c.h.b16 %v200
    %v598 = vunpack.c.l.b16 %v201
    %v599 = vunpack.c.h.b16 %v201
    %v600 = vunpack.c.l.b16 %v202
    %v601 = vunpack.c.h.b16 %v202
    %v602 = vunpack.c.l.b16 %v203
    %v603 = vunpack.c.h.b16 %v203
    %v604 = vunpack.c.l.b16 %v204
    %v605 = vunpack.c.h.b16 %v204
    %v606 = vunpack.c.l.b16 %v205
    %v607 = vunpack.c.h.b16 %v205
    %v608 = vunpack.c.l.b16 %v206
    %v609 = vunpack.c.h.b16 %v206
    %v610 = vunpack.c.l.b16 %v207
    %v611 = vunpack.c.h.b16 %v207
    %v612 = vpack.c.b16 %v360, %v356
    %v613 = vpack.c.b16 %v361, %v357
    %v614 = vpack.c.b16 %v362, %v358
    %v615 = vpack.c.b16 %v363, %v359
    %v616 = vpack.c.b16 %v368, %v364
    %v617 = vpack.c.b16 %v369, %v365
    %v618 = vpack.c.b16 %v370, %v366
    %v619 = vpack.c.b16 %v371, %v367
    %v620 = vpack.c.b16 %v376, %v372
    %v621 = vpack.c.b16 %v377, %v373
    %v622 = vpack.c.b16 %v378, %v374
    %v623 = vpack.c.b16 %v379, %v375
    %v624 = vpack.c.b16 %v384, %v380
    %v625 = vpack.c.b16 %v385, %v381
    %v626 = vpack.c.b16 %v386, %v382
    %v627 = vpack.c.b16 %v387, %v383
    %v628 = vpack.c.b16 %v392, %v388
    %v629 = vpack.c.b16 %v393, %v389
    %v630 = vpack.c.b16 %v394, %v390
    %v631 = vpack.c.b16 %v395, %v391
    %v632 = vpack.c.b16 %v400, %v396
    %v633 = vpack.c.b16 %v401, %v397
    %v634 = vpack.c.b16 %v402, %v398
    %v635 = vpack.c.b16 %v403, %v399
    %v636 = vpack.c.b16 %v408, %v404
    %v637 = vpack.c.b16 %v409, %v405
    %v638 = vpack.c.b16 %v410, %v406
    %v639 = vpack.c.b16 %v411, %v407
    %v640 = vpack.c.b16 %v416, %v412
    %v641 = vpack.c.b16 %v417, %v413
    %v642 = vpack.c.b16 %v418, %v414
    %v643 = vpack.c.b16 %v419, %v415
    %v644 = vpack.c.b16 %v424, %v420
    %v645 = vpack.c.b16 %v425, %v421
    %v646 = vpack.c.b16 %v426, %v422
    %v647 = vpack.c.b16 %v427, %v423
    %v648 = vpack.c.b16 %v432, %v428
    %v649 = vpack.c.b16 %v433, %v429
    %v650 = vpack.c.b16 %v434, %v430
    %v651 = vpack.c.b16 %v435, %v431
    %v652 = vpack.c.b16 %v440, %v436
    %v653 = vpack.c.b16 %v441, %v437
    %v654 = vpack.c.b16 %v442, %v438
    %v655 = vpack.c.b16 %v443, %v439
    %v656 = vpack.c.b16 %v448, %v444
    %v657 = vpack.c.b16 %v449, %v445
    %v658 = vpack.c.b16 %v450, %v446
    %v659 = vpack.c.b16 %v451, %v447
    %v660 = vpack.c.b16 %v456, %v452
    %v661 = vpack.c.b16 %v457, %v453
    %v662 = vpack.c.b16 %v458, %v454
    %v663 = vpack.c.b16 %v459, %v455
    %v664 = vpack.c.b16 %v464, %v460
    %v665 = vpack.c.b16 %v465, %v461
    %v666 = vpack.c.b16 %v466, %v462
    %v667 = vpack.c.b16 %v467, %v463
    %v668 = vpack.c.b16 %v472, %v468
    %v669 = vpack.c.b16 %v473, %v469
    %v670 = vpack.c.b16 %v474, %v470
    %v671 = vpack.c.b16 %v475, %v471
    %v672 = vpack.c.b16 %v480, %v476
    %v673 = vpack.c.b16 %v481, %v477
    %v674 = vpack.c.b16 %v482, %v478
    %v675 = vpack.c.b16 %v483, %v479
    %v676 = vpack.c.b16 %v488, %v484
    %v677 = vpack.c.b16 %v489, %v485
    %v678 = vpack.c.b16 %v490, %v486
    %v679 = vpack.c.b16 %v491, %v487
    %v680 = vpack.c.b16 %v496, %v492
    %v681 = vpack.c.b16 %v497, %v493
    %v682 = vpack.c.b16 %v498, %v494
    %v683 = vpack.c.b16 %v499, %v495
    %v684 = vpack.c.b16 %v504, %v500
    %v685 = vpack.c.b16 %v505, %v501
    %v686 = vpack.c.b16 %v506, %v502
    %v687 = vpack.c.b16 %v507, %v503
    %v688 = vpack.c.b16 %v512, %v508
    %v689 = vpack.c.b16 %v513, %v509
    %v690 = vpack.c.b16 %v514, %v510
    %v691 = vpack.c.b16 %v515, %v511
    %v692 = vpack.c.b16 %v520, %v516
    %v693 = vpack.c.b16 %v521, %v517
    %v694 = vpack.c.b16 %v522, %v518
    %v695 = vpack.c.b16 %v523, %v519
    %v696 = vpack.c.b16 %v528, %v524
    %v697 = vpack.c.b16 %v529, %v525
    %v698 = vpack.c.b16 %v530, %v526
    %v699 = vpack.c.b16 %v531, %v527
    %v700 = vpack.c.b16 %v536, %v532
    %v701 = vpack.c.b16 %v537, %v533
    %v702 = vpack.c.b16 %v538, %v534
    %v703 = vpack.c.b16 %v539, %v535
    %v704 = vpack.c.b16 %v544, %v540
    %v705 = vpack.c.b16 %v545, %v541
    %v706 = vpack.c.b16 %v546, %v542
    %v707 = vpack.c.b16 %v547, %v543
    %v708 = vpack.c.b16 %v552, %v548
    %v709 = vpack.c.b16 %v553, %v549
    %v710 = vpack.c.b16 %v554, %v550
    %v711 = vpack.c.b16 %v555, %v551
    %v712 = vpack.c.b16 %v560, %v556
    %v713 = vpack.c.b16 %v561, %v557
    %v714 = vpack.c.b16 %v562, %v558
    %v715 = vpack.c.b16 %v563, %v559
    %v716 = vpack.c.b16 %v568, %v564
    %v717 = vpack.c.b16 %v569, %v565
    %v718 = vpack.c.b16 %v570, %v566
    %v719 = vpack.c.b16 %v571, %v567
    %v720 = vpack.c.b16 %v576, %v572
    %v721 = vpack.c.b16 %v577, %v573
    %v722 = vpack.c.b16 %v578, %v574
    %v723 = vpack.c.b16 %v579, %v575
    %v724 = vpack.c.b16 %v584, %v580
    %v725 = vpack.c.b16 %v585, %v581
    %v726 = vpack.c.b16 %v586, %v582
    %v727 = vpack.c.b16 %v587, %v583
    %v728 = vpack.c.b16 %v592, %v588
    %v729 = vpack.c.b16 %v593, %v589
    %v730 = vpack.c.b16 %v594, %v590
    %v731 = vpack.c.b16 %v595, %v591
    %v732 = vpack.c.b16 %v600, %v596
    %v733 = vpack.c.b16 %v601, %v597
    %v734 = vpack.c.b16 %v602, %v598
    %v735 = vpack.c.b16 %v603, %v599
    %v736 = vpack.c.b16 %v608, %v604
    %v737 = vpack.c.b16 %v609, %v605
    %v738 = vpack.c.b16 %v610, %v606
    %v739 = vpack.c.b16 %v611, %v607
    %868 = vmatprep.subr.bf16.mxu0 %v641
    %869 = vmatpush1.bf16.msra.mxu0 %v640
    %870 = vmatprep.subr.bf16.mxu0 %v637
    %871 = vmatpush1.bf16.msra.mxu0 %v636
    %872 = vmatprep.subr.bf16.mxu0 %v633
    %873 = vmatpush1.bf16.msra.mxu0 %v632
    %874 = vmatprep.subr.bf16.mxu0 %v629
    %875 = vmatpush1.bf16.msra.mxu0 %v628
    %876 = vmatprep.subr.bf16.mxu0 %v625
    %877 = vmatpush1.bf16.msra.mxu0 %v624
    %878 = vmatprep.subr.bf16.mxu0 %v621
    %879 = vmatpush1.bf16.msra.mxu0 %v620
    %880 = vmatprep.subr.bf16.mxu0 %v617
    %881 = vmatpush1.bf16.msra.mxu0 %v616
    %882 = vmatprep.subr.bf16.mxu0 %v613
    %883 = vmatpush1.bf16.msra.mxu0 %v612
    %884 = vmatprep.subr.bf16.mxu0 %v673
    %885 = vmatpush2.bf16.msra.mxu0 %v672
    %886 = vmatprep.subr.bf16.mxu0 %v669
    %887 = vmatpush2.bf16.msra.mxu0 %v668
    %888 = vmatprep.subr.bf16.mxu0 %v665
    %889 = vmatpush2.bf16.msra.mxu0 %v664
    %890 = vmatprep.subr.bf16.mxu0 %v661
    %891 = vmatpush2.bf16.msra.mxu0 %v660
    %892 = vmatprep.subr.bf16.mxu0 %v657
    %893 = vmatpush2.bf16.msra.mxu0 %v656
    %894 = vmatprep.subr.bf16.mxu0 %v653
    %895 = vmatpush2.bf16.msra.mxu0 %v652
    %896 = vmatprep.subr.bf16.mxu0 %v649
    %897 = vmatpush2.bf16.msra.mxu0 %v648
    %898 = vmatprep.subr.bf16.mxu0 %v645
    %899 = vmatpush2.bf16.msra.mxu0 %v644
    %900 = vmatprep.mubr.bf16.mxu0 %v221
    %901 = vmatmul.mubr.bf16.gmra.mxu0 %v220
    %v902 = vpop.f32.mrf.mxu0
    %v903 = vadd.f32 0.0, %v902
    %v904 = vpop.f32.mrf.mxu0
    %v905 = vadd.f32 0.0, %v904
    %v906 = vpop.f32.mrf.mxu0
    %v907 = vadd.f32 0.0, %v906
    %v908 = vpop.f32.mrf.mxu0
    %v909 = vadd.f32 0.0, %v908
    %910 = vdwg.mxu0
    %911 = vmatprep.subr.bf16.mxu0 %v705
    %912 = vmatpush1.bf16.msra.mxu0 %v704
    %913 = vmatprep.subr.bf16.mxu0 %v701
    %914 = vmatpush1.bf16.msra.mxu0 %v700
    %915 = vmatprep.subr.bf16.mxu0 %v697
    %916 = vmatpush1.bf16.msra.mxu0 %v696
    %917 = vmatprep.subr.bf16.mxu0 %v693
    %918 = vmatpush1.bf16.msra.mxu0 %v692
    %919 = vmatprep.subr.bf16.mxu0 %v689
    %920 = vmatpush1.bf16.msra.mxu0 %v688
    %921 = vmatprep.subr.bf16.mxu0 %v685
    %922 = vmatpush1.bf16.msra.mxu0 %v684
    %923 = vmatprep.subr.bf16.mxu0 %v681
    %924 = vmatpush1.bf16.msra.mxu0 %v680
    %925 = vmatprep.subr.bf16.mxu0 %v677
    %926 = vmatpush1.bf16.msra.mxu0 %v676
    %927 = vmatprep.subr.bf16.mxu0 %v737
    %928 = vmatpush2.bf16.msra.mxu0 %v736
    %929 = vmatprep.subr.bf16.mxu0 %v733
    %930 = vmatpush2.bf16.msra.mxu0 %v732
    %931 = vmatprep.subr.bf16.mxu0 %v729
    %932 = vmatpush2.bf16.msra.mxu0 %v728
    %933 = vmatprep.subr.bf16.mxu0 %v725
    %934 = vmatpush2.bf16.msra.mxu0 %v724
    %935 = vmatprep.subr.bf16.mxu0 %v721
    %936 = vmatpush2.bf16.msra.mxu0 %v720
    %937 = vmatprep.subr.bf16.mxu0 %v717
    %938 = vmatpush2.bf16.msra.mxu0 %v716
    %939 = vmatprep.subr.bf16.mxu0 %v713
    %940 = vmatpush2.bf16.msra.mxu0 %v712
    %941 = vmatprep.subr.bf16.mxu0 %v709
    %942 = vmatpush2.bf16.msra.mxu0 %v708
    %943 = vmatprep.mubr.bf16.mxu0 %v223
    %944 = vmatmul.mubr.bf16.gmra.mxu0 %v222
    %v945 = vpop.f32.mrf.mxu0
    %v946 = vadd.f32 %v903, %v945
    %v947 = vpop.f32.mrf.mxu0
    %v948 = vadd.f32 %v905, %v947
    %v949 = vpop.f32.mrf.mxu0
    %v950 = vadd.f32 %v907, %v949
    %v951 = vpop.f32.mrf.mxu0
    %v952 = vadd.f32 %v909, %v951
    %953 = vdwg.mxu0
    %954 = vmatprep.subr.bf16.mxu0 %v643
    %955 = vmatpush1.bf16.msra.mxu0 %v642
    %956 = vmatprep.subr.bf16.mxu0 %v639
    %957 = vmatpush1.bf16.msra.mxu0 %v638
    %958 = vmatprep.subr.bf16.mxu0 %v635
    %959 = vmatpush1.bf16.msra.mxu0 %v634
    %960 = vmatprep.subr.bf16.mxu0 %v631
    %961 = vmatpush1.bf16.msra.mxu0 %v630
    %962 = vmatprep.subr.bf16.mxu0 %v627
    %963 = vmatpush1.bf16.msra.mxu0 %v626
    %964 = vmatprep.subr.bf16.mxu0 %v623
    %965 = vmatpush1.bf16.msra.mxu0 %v622
    %966 = vmatprep.subr.bf16.mxu0 %v619
    %967 = vmatpush1.bf16.msra.mxu0 %v618
    %968 = vmatprep.subr.bf16.mxu0 %v615
    %969 = vmatpush1.bf16.msra.mxu0 %v614
    %970 = vmatprep.subr.bf16.mxu0 %v675
    %971 = vmatpush2.bf16.msra.mxu0 %v674
    %972 = vmatprep.subr.bf16.mxu0 %v671
    %973 = vmatpush2.bf16.msra.mxu0 %v670
    %974 = vmatprep.subr.bf16.mxu0 %v667
    %975 = vmatpush2.bf16.msra.mxu0 %v666
    %976 = vmatprep.subr.bf16.mxu0 %v663
    %977 = vmatpush2.bf16.msra.mxu0 %v662
    %978 = vmatprep.subr.bf16.mxu0 %v659
    %979 = vmatpush2.bf16.msra.mxu0 %v658
    %980 = vmatprep.subr.bf16.mxu0 %v655
    %981 = vmatpush2.bf16.msra.mxu0 %v654
    %982 = vmatprep.subr.bf16.mxu0 %v651
    %983 = vmatpush2.bf16.msra.mxu0 %v650
    %984 = vmatprep.subr.bf16.mxu0 %v647
    %985 = vmatpush2.bf16.msra.mxu0 %v646
    %986 = vmatprep.mubr.bf16.mxu0 %v221
    %987 = vmatmul.mubr.bf16.gmra.mxu0 %v220
    %v988 = vpop.f32.mrf.mxu0
    %v989 = vadd.f32 0.0, %v988
    %v990 = vpop.f32.mrf.mxu0
    %v991 = vadd.f32 0.0, %v990
    %v992 = vpop.f32.mrf.mxu0
    %v993 = vadd.f32 0.0, %v992
    %v994 = vpop.f32.mrf.mxu0
    %v995 = vadd.f32 0.0, %v994
    %996 = vdwg.mxu0
    %997 = vmatprep.subr.bf16.mxu0 %v707
    %998 = vmatpush1.bf16.msra.mxu0 %v706
    %999 = vmatprep.subr.bf16.mxu0 %v703
    %1000 = vmatpush1.bf16.msra.mxu0 %v702
    %1001 = vmatprep.subr.bf16.mxu0 %v699
    %1002 = vmatpush1.bf16.msra.mxu0 %v698
    %1003 = vmatprep.subr.bf16.mxu0 %v695
    %1004 = vmatpush1.bf16.msra.mxu0 %v694
    %1005 = vmatprep.subr.bf16.mxu0 %v691
    %1006 = vmatpush1.bf16.msra.mxu0 %v690
    %1007 = vmatprep.subr.bf16.mxu0 %v687
    %1008 = vmatpush1.bf16.msra.mxu0 %v686
    %1009 = vmatprep.subr.bf16.mxu0 %v683
    %1010 = vmatpush1.bf16.msra.mxu0 %v682
    %1011 = vmatprep.subr.bf16.mxu0 %v679
    %1012 = vmatpush1.bf16.msra.mxu0 %v678
    %1013 = vmatprep.subr.bf16.mxu0 %v739
    %1014 = vmatpush2.bf16.msra.mxu0 %v738
    %1015 = vmatprep.subr.bf16.mxu0 %v735
    %1016 = vmatpush2.bf16.msra.mxu0 %v734
    %1017 = vmatprep.subr.bf16.mxu0 %v731
    %1018 = vmatpush2.bf16.msra.mxu0 %v730
    %1019 = vmatprep.subr.bf16.mxu0 %v727
    %1020 = vmatpush2.bf16.msra.mxu0 %v726
    %1021 = vmatprep.subr.bf16.mxu0 %v723
    %1022 = vmatpush2.bf16.msra.mxu0 %v722
    %1023 = vmatprep.subr.bf16.mxu0 %v719
    %1024 = vmatpush2.bf16.msra.mxu0 %v718
    %1025 = vmatprep.subr.bf16.mxu0 %v715
    %1026 = vmatpush2.bf16.msra.mxu0 %v714
    %1027 = vmatprep.subr.bf16.mxu0 %v711
    %1028 = vmatpush2.bf16.msra.mxu0 %v710
    %1029 = vmatprep.mubr.bf16.mxu0 %v223
    %1030 = vmatmul.mubr.bf16.gmra.mxu0 %v222
    %v1031 = vpop.f32.mrf.mxu0
    %v1032 = vadd.f32 %v989, %v1031
    %v1033 = vpop.f32.mrf.mxu0
    %v1034 = vadd.f32 %v991, %v1033
    %v1035 = vpop.f32.mrf.mxu0
    %v1036 = vadd.f32 %v993, %v1035
    %v1037 = vpop.f32.mrf.mxu0
    %v1038 = vadd.f32 %v995, %v1037
    %1039 = vdwg.mxu0
    %v1040 = vpack.c.bf16 %v950, %v946
    %v1041 = vpack.c.bf16 %v952, %v948
    %v1042 = vpack.c.bf16 %v1036, %v1032
    %v1043 = vpack.c.bf16 %v1038, %v1034
    %v1048 = vunpack.c.l.b16 %v1040
    %v1049 = vunpack.c.l.b16 %v1041
    %v1050 = vunpack.c.l.b16 %v1042
    %v1051 = vunpack.c.l.b16 %v1043
    %v1052 = vunpack.c.h.b16 %v1040
    %v1053 = vunpack.c.h.b16 %v1041
    %v1054 = vunpack.c.h.b16 %v1042
    %v1055 = vunpack.c.h.b16 %v1043
    %v1056 = vpack.c.b16 %v1049, %v1048
    %v1057 = vpack.c.b16 %v1051, %v1050
    %v1058 = vpack.c.b16 %v1053, %v1052
    %v1059 = vpack.c.b16 %v1055, %v1054
    %1064 = vst [vmem:[#allocation10] sm:$0xff] %v1056
    %1065 = vst [vmem:[#allocation10 + $0x8] sm:$0xff] %v1057
    %1066 = vst [vmem:[#allocation10 + $0x10] sm:$0xff] %v1058
    %1067 = vst [vmem:[#allocation10 + $0x18] sm:$0xff] %v1059
    %v1068 = vld [vmem:[#allocation5] sm:$0xff]
    %v1069 = vld [vmem:[#allocation5 + $0x8] sm:$0xff]
    %v1070 = vld [vmem:[#allocation5 + $0x10] sm:$0xff]
    %v1071 = vld [vmem:[#allocation5 + $0x18] sm:$0xff]
    %v1072 = vld [vmem:[#allocation5 + $0x20] sm:$0xff]
    %v1073 = vld [vmem:[#allocation5 + $0x28] sm:$0xff]
    %v1074 = vld [vmem:[#allocation8] sm:$0xff]
    %v1075 = vld [vmem:[#allocation8 + $0x8] sm:$0xff]
    %v1076 = vld [vmem:[#allocation8 + $0x10] sm:$0xff]
    %v1077 = vld [vmem:[#allocation8 + $0x18] sm:$0xff]
    %v1078 = vld [vmem:[#allocation8 + $0x20] sm:$0xff]
    %v1079 = vld [vmem:[#allocation8 + $0x28] sm:$0xff]
    %v1080 = vld [vmem:[#allocation8 + $0x30] sm:$0xff]
    %v1081 = vld [vmem:[#allocation8 + $0x38] sm:$0xff]
    %v1082 = vld [vmem:[#allocation8 + $0x40] sm:$0xff]
    %v1083 = vld [vmem:[#allocation8 + $0x48] sm:$0xff]
    %v1084 = vld [vmem:[#allocation8 + $0x50] sm:$0xff]
    %v1085 = vld [vmem:[#allocation8 + $0x58] sm:$0xff]
    %v1086 = vld [vmem:[#allocation8 + $0x60] sm:$0xff]
    %v1087 = vld [vmem:[#allocation8 + $0x68] sm:$0xff]
    %v1088 = vld [vmem:[#allocation8 + $0x70] sm:$0xff]
    %v1089 = vld [vmem:[#allocation8 + $0x78] sm:$0xff]
    %v1090 = vld [vmem:[#allocation8 + $0x80] sm:$0xff]
    %v1091 = vld [vmem:[#allocation8 + $0x88] sm:$0xff]
    %v1092 = vld [vmem:[#allocation8 + $0x90] sm:$0xff]
    %v1093 = vld [vmem:[#allocation8 + $0x98] sm:$0xff]
    %v1094 = vld [vmem:[#allocation8 + $0xa0] sm:$0xff]
    %v1095 = vld [vmem:[#allocation8 + $0xa8] sm:$0xff]
    %v1096 = vld [vmem:[#allocation8 + $0xb0] sm:$0xff]
    %v1097 = vld [vmem:[#allocation8 + $0xb8] sm:$0xff]
    %v1098 = vld [vmem:[#allocation8 + $0xc0] sm:$0xff]
    %v1099 = vld [vmem:[#allocation8 + $0xc8] sm:$0xff]
    %v1100 = vld [vmem:[#allocation8 + $0xd0] sm:$0xff]
    %v1101 = vld [vmem:[#allocation8 + $0xd8] sm:$0xff]
    %v1102 = vld [vmem:[#allocation8 + $0xe0] sm:$0xff]
    %v1103 = vld [vmem:[#allocation8 + $0xe8] sm:$0xff]
    %v1104 = vld [vmem:[#allocation8 + $0xf0] sm:$0xff]
    %v1105 = vld [vmem:[#allocation8 + $0xf8] sm:$0xff]
    %v1106 = vld [vmem:[#allocation8 + $0x100] sm:$0xff]
    %v1107 = vld [vmem:[#allocation8 + $0x108] sm:$0xff]
    %v1108 = vld [vmem:[#allocation8 + $0x110] sm:$0xff]
    %v1109 = vld [vmem:[#allocation8 + $0x118] sm:$0xff]
    %v1110 = vld [vmem:[#allocation8 + $0x120] sm:$0xff]
    %v1111 = vld [vmem:[#allocation8 + $0x128] sm:$0xff]
    %v1112 = vld [vmem:[#allocation8 + $0x130] sm:$0xff]
    %v1113 = vld [vmem:[#allocation8 + $0x138] sm:$0xff]
    %v1114 = vld [vmem:[#allocation8 + $0x140] sm:$0xff]
    %v1115 = vld [vmem:[#allocation8 + $0x148] sm:$0xff]
    %v1116 = vld [vmem:[#allocation8 + $0x150] sm:$0xff]
    %v1117 = vld [vmem:[#allocation8 + $0x158] sm:$0xff]
    %v1118 = vld [vmem:[#allocation8 + $0x160] sm:$0xff]
    %v1119 = vld [vmem:[#allocation8 + $0x168] sm:$0xff]
    %v1120 = vld [vmem:[#allocation8 + $0x170] sm:$0xff]
    %v1121 = vld [vmem:[#allocation8 + $0x178] sm:$0xff]
    %v1122 = vld [vmem:[#allocation8 + $0x180] sm:$0xff]
    %v1123 = vld [vmem:[#allocation8 + $0x188] sm:$0xff]
    %v1124 = vld [vmem:[#allocation8 + $0x190] sm:$0xff]
    %v1125 = vld [vmem:[#allocation8 + $0x198] sm:$0xff]
    %v1126 = vld [vmem:[#allocation8 + $0x1a0] sm:$0xff]
    %v1127 = vld [vmem:[#allocation8 + $0x1a8] sm:$0xff]
    %v1128 = vld [vmem:[#allocation8 + $0x1b0] sm:$0xff]
    %v1129 = vld [vmem:[#allocation8 + $0x1b8] sm:$0xff]
    %v1130 = vld [vmem:[#allocation8 + $0x1c0] sm:$0xff]
    %v1131 = vld [vmem:[#allocation8 + $0x1c8] sm:$0xff]
    %v1132 = vld [vmem:[#allocation8 + $0x1d0] sm:$0xff]
    %v1133 = vld [vmem:[#allocation8 + $0x1d8] sm:$0xff]
    %v1134 = vld [vmem:[#allocation8 + $0x1e0] sm:$0xff]
    %v1135 = vld [vmem:[#allocation8 + $0x1e8] sm:$0xff]
    %v1136 = vld [vmem:[#allocation8 + $0x1f0] sm:$0xff]
    %v1137 = vld [vmem:[#allocation8 + $0x1f8] sm:$0xff]
    %v1138 = vld [vmem:[#allocation8 + $0x200] sm:$0xff]
    %v1139 = vld [vmem:[#allocation8 + $0x208] sm:$0xff]
    %v1140 = vld [vmem:[#allocation8 + $0x210] sm:$0xff]
    %v1141 = vld [vmem:[#allocation8 + $0x218] sm:$0xff]
    %v1142 = vld [vmem:[#allocation8 + $0x220] sm:$0xff]
    %v1143 = vld [vmem:[#allocation8 + $0x228] sm:$0xff]
    %v1144 = vld [vmem:[#allocation8 + $0x230] sm:$0xff]
    %v1145 = vld [vmem:[#allocation8 + $0x238] sm:$0xff]
    %v1146 = vld [vmem:[#allocation8 + $0x240] sm:$0xff]
    %v1147 = vld [vmem:[#allocation8 + $0x248] sm:$0xff]
    %v1148 = vld [vmem:[#allocation8 + $0x250] sm:$0xff]
    %v1149 = vld [vmem:[#allocation8 + $0x258] sm:$0xff]
    %v1150 = vld [vmem:[#allocation8 + $0x260] sm:$0xff]
    %v1151 = vld [vmem:[#allocation8 + $0x268] sm:$0xff]
    %v1152 = vld [vmem:[#allocation8 + $0x270] sm:$0xff]
    %v1153 = vld [vmem:[#allocation8 + $0x278] sm:$0xff]
    %v1154 = vld [vmem:[#allocation8 + $0x280] sm:$0xff]
    %v1155 = vld [vmem:[#allocation8 + $0x288] sm:$0xff]
    %v1156 = vld [vmem:[#allocation8 + $0x290] sm:$0xff]
    %v1157 = vld [vmem:[#allocation8 + $0x298] sm:$0xff]
    %v1158 = vld [vmem:[#allocation8 + $0x2a0] sm:$0xff]
    %v1159 = vld [vmem:[#allocation8 + $0x2a8] sm:$0xff]
    %v1160 = vld [vmem:[#allocation8 + $0x2b0] sm:$0xff]
    %v1161 = vld [vmem:[#allocation8 + $0x2b8] sm:$0xff]
    %v1162 = vld [vmem:[#allocation8 + $0x2c0] sm:$0xff]
    %v1163 = vld [vmem:[#allocation8 + $0x2c8] sm:$0xff]
    %v1164 = vld [vmem:[#allocation8 + $0x2d0] sm:$0xff]
    %v1165 = vld [vmem:[#allocation8 + $0x2d8] sm:$0xff]
    %v1166 = vld [vmem:[#allocation8 + $0x2e0] sm:$0xff]
    %v1167 = vld [vmem:[#allocation8 + $0x2e8] sm:$0xff]
    %v1168 = vld [vmem:[#allocation8 + $0x2f0] sm:$0xff]
    %v1169 = vld [vmem:[#allocation8 + $0x2f8] sm:$0xff]
    %v1170 = vld [vmem:[#allocation8 + $0x300] sm:$0xff]
    %v1171 = vld [vmem:[#allocation8 + $0x308] sm:$0xff]
    %v1172 = vld [vmem:[#allocation8 + $0x310] sm:$0xff]
    %v1173 = vld [vmem:[#allocation8 + $0x318] sm:$0xff]
    %v1174 = vld [vmem:[#allocation8 + $0x320] sm:$0xff]
    %v1175 = vld [vmem:[#allocation8 + $0x328] sm:$0xff]
    %v1176 = vld [vmem:[#allocation8 + $0x330] sm:$0xff]
    %v1177 = vld [vmem:[#allocation8 + $0x338] sm:$0xff]
    %v1178 = vld [vmem:[#allocation8 + $0x340] sm:$0xff]
    %v1179 = vld [vmem:[#allocation8 + $0x348] sm:$0xff]
    %v1180 = vld [vmem:[#allocation8 + $0x350] sm:$0xff]
    %v1181 = vld [vmem:[#allocation8 + $0x358] sm:$0xff]
    %v1182 = vld [vmem:[#allocation8 + $0x360] sm:$0xff]
    %v1183 = vld [vmem:[#allocation8 + $0x368] sm:$0xff]
    %v1184 = vld [vmem:[#allocation8 + $0x370] sm:$0xff]
    %v1185 = vld [vmem:[#allocation8 + $0x378] sm:$0xff]
    %v1186 = vld [vmem:[#allocation8 + $0x380] sm:$0xff]
    %v1187 = vld [vmem:[#allocation8 + $0x388] sm:$0xff]
    %v1188 = vld [vmem:[#allocation8 + $0x390] sm:$0xff]
    %v1189 = vld [vmem:[#allocation8 + $0x398] sm:$0xff]
    %v1190 = vld [vmem:[#allocation8 + $0x3a0] sm:$0xff]
    %v1191 = vld [vmem:[#allocation8 + $0x3a8] sm:$0xff]
    %v1192 = vld [vmem:[#allocation8 + $0x3b0] sm:$0xff]
    %v1193 = vld [vmem:[#allocation8 + $0x3b8] sm:$0xff]
    %v1194 = vld [vmem:[#allocation8 + $0x3c0] sm:$0xff]
    %v1195 = vld [vmem:[#allocation8 + $0x3c8] sm:$0xff]
    %v1196 = vld [vmem:[#allocation8 + $0x3d0] sm:$0xff]
    %v1197 = vld [vmem:[#allocation8 + $0x3d8] sm:$0xff]
    %v1198 = vld [vmem:[#allocation8 + $0x3e0] sm:$0xff]
    %v1199 = vld [vmem:[#allocation8 + $0x3e8] sm:$0xff]
    %v1200 = vld [vmem:[#allocation8 + $0x3f0] sm:$0xff]
    %v1201 = vld [vmem:[#allocation8 + $0x3f8] sm:$0xff]
    %v1202 = vld [vmem:[#allocation8 + $0x400] sm:$0xff]
    %v1203 = vld [vmem:[#allocation8 + $0x408] sm:$0xff]
    %v1204 = vld [vmem:[#allocation8 + $0x410] sm:$0xff]
    %v1205 = vld [vmem:[#allocation8 + $0x418] sm:$0xff]
    %v1206 = vld [vmem:[#allocation8 + $0x420] sm:$0xff]
    %v1207 = vld [vmem:[#allocation8 + $0x428] sm:$0xff]
    %v1208 = vld [vmem:[#allocation8 + $0x430] sm:$0xff]
    %v1209 = vld [vmem:[#allocation8 + $0x438] sm:$0xff]
    %v1210 = vld [vmem:[#allocation8 + $0x440] sm:$0xff]
    %v1211 = vld [vmem:[#allocation8 + $0x448] sm:$0xff]
    %v1212 = vld [vmem:[#allocation8 + $0x450] sm:$0xff]
    %v1213 = vld [vmem:[#allocation8 + $0x458] sm:$0xff]
    %v1214 = vld [vmem:[#allocation8 + $0x460] sm:$0xff]
    %v1215 = vld [vmem:[#allocation8 + $0x468] sm:$0xff]
    %v1216 = vld [vmem:[#allocation8 + $0x470] sm:$0xff]
    %v1217 = vld [vmem:[#allocation8 + $0x478] sm:$0xff]
    %v1218 = vld [vmem:[#allocation8 + $0x480] sm:$0xff]
    %v1219 = vld [vmem:[#allocation8 + $0x488] sm:$0xff]
    %v1220 = vld [vmem:[#allocation8 + $0x490] sm:$0xff]
    %v1221 = vld [vmem:[#allocation8 + $0x498] sm:$0xff]
    %v1222 = vld [vmem:[#allocation8 + $0x4a0] sm:$0xff]
    %v1223 = vld [vmem:[#allocation8 + $0x4a8] sm:$0xff]
    %v1224 = vld [vmem:[#allocation8 + $0x4b0] sm:$0xff]
    %v1225 = vld [vmem:[#allocation8 + $0x4b8] sm:$0xff]
    %v1226 = vld [vmem:[#allocation8 + $0x4c0] sm:$0xff]
    %v1227 = vld [vmem:[#allocation8 + $0x4c8] sm:$0xff]
    %v1228 = vld [vmem:[#allocation8 + $0x4d0] sm:$0xff]
    %v1229 = vld [vmem:[#allocation8 + $0x4d8] sm:$0xff]
    %v1230 = vld [vmem:[#allocation8 + $0x4e0] sm:$0xff]
    %v1231 = vld [vmem:[#allocation8 + $0x4e8] sm:$0xff]
    %v1232 = vld [vmem:[#allocation8 + $0x4f0] sm:$0xff]
    %v1233 = vld [vmem:[#allocation8 + $0x4f8] sm:$0xff]
    %v1234 = vld [vmem:[#allocation8 + $0x500] sm:$0xff]
    %v1235 = vld [vmem:[#allocation8 + $0x508] sm:$0xff]
    %v1236 = vld [vmem:[#allocation8 + $0x510] sm:$0xff]
    %v1237 = vld [vmem:[#allocation8 + $0x518] sm:$0xff]
    %v1238 = vld [vmem:[#allocation8 + $0x520] sm:$0xff]
    %v1239 = vld [vmem:[#allocation8 + $0x528] sm:$0xff]
    %v1240 = vld [vmem:[#allocation8 + $0x530] sm:$0xff]
    %v1241 = vld [vmem:[#allocation8 + $0x538] sm:$0xff]
    %v1242 = vld [vmem:[#allocation8 + $0x540] sm:$0xff]
    %v1243 = vld [vmem:[#allocation8 + $0x548] sm:$0xff]
    %v1244 = vld [vmem:[#allocation8 + $0x550] sm:$0xff]
    %v1245 = vld [vmem:[#allocation8 + $0x558] sm:$0xff]
    %v1246 = vld [vmem:[#allocation8 + $0x560] sm:$0xff]
    %v1247 = vld [vmem:[#allocation8 + $0x568] sm:$0xff]
    %v1248 = vld [vmem:[#allocation8 + $0x570] sm:$0xff]
    %v1249 = vld [vmem:[#allocation8 + $0x578] sm:$0xff]
    %v1250 = vld [vmem:[#allocation8 + $0x580] sm:$0xff]
    %v1251 = vld [vmem:[#allocation8 + $0x588] sm:$0xff]
    %v1252 = vld [vmem:[#allocation8 + $0x590] sm:$0xff]
    %v1253 = vld [vmem:[#allocation8 + $0x598] sm:$0xff]
    %v1254 = vld [vmem:[#allocation8 + $0x5a0] sm:$0xff]
    %v1255 = vld [vmem:[#allocation8 + $0x5a8] sm:$0xff]
    %v1256 = vld [vmem:[#allocation8 + $0x5b0] sm:$0xff]
    %v1257 = vld [vmem:[#allocation8 + $0x5b8] sm:$0xff]
    %v1258 = vld [vmem:[#allocation8 + $0x5c0] sm:$0xff]
    %v1259 = vld [vmem:[#allocation8 + $0x5c8] sm:$0xff]
    %v1260 = vld [vmem:[#allocation8 + $0x5d0] sm:$0xff]
    %v1261 = vld [vmem:[#allocation8 + $0x5d8] sm:$0xff]
    %v1262 = vld [vmem:[#allocation8 + $0x5e0] sm:$0xff]
    %v1263 = vld [vmem:[#allocation8 + $0x5e8] sm:$0xff]
    %v1264 = vld [vmem:[#allocation8 + $0x5f0] sm:$0xff]
    %v1265 = vld [vmem:[#allocation8 + $0x5f8] sm:$0xff]
    %v1272 = vunpack.c.l.b16 %v1068
    %v1273 = vunpack.c.h.b16 %v1068
    %v1274 = vunpack.c.l.b16 %v1069
    %v1275 = vunpack.c.h.b16 %v1069
    %v1276 = vunpack.c.l.b16 %v1070
    %v1277 = vunpack.c.h.b16 %v1070
    %v1278 = vunpack.c.l.b16 %v1071
    %v1279 = vunpack.c.h.b16 %v1071
    %v1280 = vunpack.c.l.b16 %v1072
    %v1281 = vunpack.c.h.b16 %v1072
    %v1282 = vunpack.c.l.b16 %v1073
    %v1283 = vunpack.c.h.b16 %v1073
    %v1284 = vpack.c.b16 %v1278, %v1272
    %v1285 = vpack.c.b16 %v1279, %v1273
    %v1286 = vpack.c.b16 %v1280, %v1274
    %v1287 = vpack.c.b16 %v1281, %v1275
    %v1288 = vpack.c.b16 %v1282, %v1276
    %v1289 = vpack.c.b16 %v1283, %v1277
    %v1488 = vunpack.c.l.b16 %v1074
    %v1489 = vunpack.c.h.b16 %v1074
    %v1490 = vunpack.c.l.b16 %v1075
    %v1491 = vunpack.c.h.b16 %v1075
    %v1492 = vunpack.c.l.b16 %v1076
    %v1493 = vunpack.c.h.b16 %v1076
    %v1494 = vunpack.c.l.b16 %v1077
    %v1495 = vunpack.c.h.b16 %v1077
    %v1496 = vunpack.c.l.b16 %v1078
    %v1497 = vunpack.c.h.b16 %v1078
    %v1498 = vunpack.c.l.b16 %v1079
    %v1499 = vunpack.c.h.b16 %v1079
    %v1500 = vunpack.c.l.b16 %v1080
    %v1501 = vunpack.c.h.b16 %v1080
    %v1502 = vunpack.c.l.b16 %v1081
    %v1503 = vunpack.c.h.b16 %v1081
    %v1504 = vunpack.c.l.b16 %v1082
    %v1505 = vunpack.c.h.b16 %v1082
    %v1506 = vunpack.c.l.b16 %v1083
    %v1507 = vunpack.c.h.b16 %v1083
    %v1508 = vunpack.c.l.b16 %v1084
    %v1509 = vunpack.c.h.b16 %v1084
    %v1510 = vunpack.c.l.b16 %v1085
    %v1511 = vunpack.c.h.b16 %v1085
    %v1512 = vunpack.c.l.b16 %v1086
    %v1513 = vunpack.c.h.b16 %v1086
    %v1514 = vunpack.c.l.b16 %v1087
    %v1515 = vunpack.c.h.b16 %v1087
    %v1516 = vunpack.c.l.b16 %v1088
    %v1517 = vunpack.c.h.b16 %v1088
    %v1518 = vunpack.c.l.b16 %v1089
    %v1519 = vunpack.c.h.b16 %v1089
    %v1520 = vunpack.c.l.b16 %v1090
    %v1521 = vunpack.c.h.b16 %v1090
    %v1522 = vunpack.c.l.b16 %v1091
    %v1523 = vunpack.c.h.b16 %v1091
    %v1524 = vunpack.c.l.b16 %v1092
    %v1525 = vunpack.c.h.b16 %v1092
    %v1526 = vunpack.c.l.b16 %v1093
    %v1527 = vunpack.c.h.b16 %v1093
    %v1528 = vunpack.c.l.b16 %v1094
    %v1529 = vunpack.c.h.b16 %v1094
    %v1530 = vunpack.c.l.b16 %v1095
    %v1531 = vunpack.c.h.b16 %v1095
    %v1532 = vunpack.c.l.b16 %v1096
    %v1533 = vunpack.c.h.b16 %v1096
    %v1534 = vunpack.c.l.b16 %v1097
    %v1535 = vunpack.c.h.b16 %v1097
    %v1536 = vunpack.c.l.b16 %v1098
    %v1537 = vunpack.c.h.b16 %v1098
    %v1538 = vunpack.c.l.b16 %v1099
    %v1539 = vunpack.c.h.b16 %v1099
    %v1540 = vunpack.c.l.b16 %v1100
    %v1541 = vunpack.c.h.b16 %v1100
    %v1542 = vunpack.c.l.b16 %v1101
    %v1543 = vunpack.c.h.b16 %v1101
    %v1544 = vunpack.c.l.b16 %v1102
    %v1545 = vunpack.c.h.b16 %v1102
    %v1546 = vunpack.c.l.b16 %v1103
    %v1547 = vunpack.c.h.b16 %v1103
    %v1548 = vunpack.c.l.b16 %v1104
    %v1549 = vunpack.c.h.b16 %v1104
    %v1550 = vunpack.c.l.b16 %v1105
    %v1551 = vunpack.c.h.b16 %v1105
    %v1552 = vunpack.c.l.b16 %v1106
    %v1553 = vunpack.c.h.b16 %v1106
    %v1554 = vunpack.c.l.b16 %v1107
    %v1555 = vunpack.c.h.b16 %v1107
    %v1556 = vunpack.c.l.b16 %v1108
    %v1557 = vunpack.c.h.b16 %v1108
    %v1558 = vunpack.c.l.b16 %v1109
    %v1559 = vunpack.c.h.b16 %v1109
    %v1560 = vunpack.c.l.b16 %v1110
    %v1561 = vunpack.c.h.b16 %v1110
    %v1562 = vunpack.c.l.b16 %v1111
    %v1563 = vunpack.c.h.b16 %v1111
    %v1564 = vunpack.c.l.b16 %v1112
    %v1565 = vunpack.c.h.b16 %v1112
    %v1566 = vunpack.c.l.b16 %v1113
    %v1567 = vunpack.c.h.b16 %v1113
    %v1568 = vunpack.c.l.b16 %v1114
    %v1569 = vunpack.c.h.b16 %v1114
    %v1570 = vunpack.c.l.b16 %v1115
    %v1571 = vunpack.c.h.b16 %v1115
    %v1572 = vunpack.c.l.b16 %v1116
    %v1573 = vunpack.c.h.b16 %v1116
    %v1574 = vunpack.c.l.b16 %v1117
    %v1575 = vunpack.c.h.b16 %v1117
    %v1576 = vunpack.c.l.b16 %v1118
    %v1577 = vunpack.c.h.b16 %v1118
    %v1578 = vunpack.c.l.b16 %v1119
    %v1579 = vunpack.c.h.b16 %v1119
    %v1580 = vunpack.c.l.b16 %v1120
    %v1581 = vunpack.c.h.b16 %v1120
    %v1582 = vunpack.c.l.b16 %v1121
    %v1583 = vunpack.c.h.b16 %v1121
    %v1584 = vunpack.c.l.b16 %v1122
    %v1585 = vunpack.c.h.b16 %v1122
    %v1586 = vunpack.c.l.b16 %v1123
    %v1587 = vunpack.c.h.b16 %v1123
    %v1588 = vunpack.c.l.b16 %v1124
    %v1589 = vunpack.c.h.b16 %v1124
    %v1590 = vunpack.c.l.b16 %v1125
    %v1591 = vunpack.c.h.b16 %v1125
    %v1592 = vunpack.c.l.b16 %v1126
    %v1593 = vunpack.c.h.b16 %v1126
    %v1594 = vunpack.c.l.b16 %v1127
    %v1595 = vunpack.c.h.b16 %v1127
    %v1596 = vunpack.c.l.b16 %v1128
    %v1597 = vunpack.c.h.b16 %v1128
    %v1598 = vunpack.c.l.b16 %v1129
    %v1599 = vunpack.c.h.b16 %v1129
    %v1600 = vunpack.c.l.b16 %v1130
    %v1601 = vunpack.c.h.b16 %v1130
    %v1602 = vunpack.c.l.b16 %v1131
    %v1603 = vunpack.c.h.b16 %v1131
    %v1604 = vunpack.c.l.b16 %v1132
    %v1605 = vunpack.c.h.b16 %v1132
    %v1606 = vunpack.c.l.b16 %v1133
    %v1607 = vunpack.c.h.b16 %v1133
    %v1608 = vunpack.c.l.b16 %v1134
    %v1609 = vunpack.c.h.b16 %v1134
    %v1610 = vunpack.c.l.b16 %v1135
    %v1611 = vunpack.c.h.b16 %v1135
    %v1612 = vunpack.c.l.b16 %v1136
    %v1613 = vunpack.c.h.b16 %v1136
    %v1614 = vunpack.c.l.b16 %v1137
    %v1615 = vunpack.c.h.b16 %v1137
    %v1616 = vunpack.c.l.b16 %v1138
    %v1617 = vunpack.c.h.b16 %v1138
    %v1618 = vunpack.c.l.b16 %v1139
    %v1619 = vunpack.c.h.b16 %v1139
    %v1620 = vunpack.c.l.b16 %v1140
    %v1621 = vunpack.c.h.b16 %v1140
    %v1622 = vunpack.c.l.b16 %v1141
    %v1623 = vunpack.c.h.b16 %v1141
    %v1624 = vunpack.c.l.b16 %v1142
    %v1625 = vunpack.c.h.b16 %v1142
    %v1626 = vunpack.c.l.b16 %v1143
    %v1627 = vunpack.c.h.b16 %v1143
    %v1628 = vunpack.c.l.b16 %v1144
    %v1629 = vunpack.c.h.b16 %v1144
    %v1630 = vunpack.c.l.b16 %v1145
    %v1631 = vunpack.c.h.b16 %v1145
    %v1632 = vunpack.c.l.b16 %v1146
    %v1633 = vunpack.c.h.b16 %v1146
    %v1634 = vunpack.c.l.b16 %v1147
    %v1635 = vunpack.c.h.b16 %v1147
    %v1636 = vunpack.c.l.b16 %v1148
    %v1637 = vunpack.c.h.b16 %v1148
    %v1638 = vunpack.c.l.b16 %v1149
    %v1639 = vunpack.c.h.b16 %v1149
    %v1640 = vunpack.c.l.b16 %v1150
    %v1641 = vunpack.c.h.b16 %v1150
    %v1642 = vunpack.c.l.b16 %v1151
    %v1643 = vunpack.c.h.b16 %v1151
    %v1644 = vunpack.c.l.b16 %v1152
    %v1645 = vunpack.c.h.b16 %v1152
    %v1646 = vunpack.c.l.b16 %v1153
    %v1647 = vunpack.c.h.b16 %v1153
    %v1648 = vunpack.c.l.b16 %v1154
    %v1649 = vunpack.c.h.b16 %v1154
    %v1650 = vunpack.c.l.b16 %v1155
    %v1651 = vunpack.c.h.b16 %v1155
    %v1652 = vunpack.c.l.b16 %v1156
    %v1653 = vunpack.c.h.b16 %v1156
    %v1654 = vunpack.c.l.b16 %v1157
    %v1655 = vunpack.c.h.b16 %v1157
    %v1656 = vunpack.c.l.b16 %v1158
    %v1657 = vunpack.c.h.b16 %v1158
    %v1658 = vunpack.c.l.b16 %v1159
    %v1659 = vunpack.c.h.b16 %v1159
    %v1660 = vunpack.c.l.b16 %v1160
    %v1661 = vunpack.c.h.b16 %v1160
    %v1662 = vunpack.c.l.b16 %v1161
    %v1663 = vunpack.c.h.b16 %v1161
    %v1664 = vunpack.c.l.b16 %v1162
    %v1665 = vunpack.c.h.b16 %v1162
    %v1666 = vunpack.c.l.b16 %v1163
    %v1667 = vunpack.c.h.b16 %v1163
    %v1668 = vunpack.c.l.b16 %v1164
    %v1669 = vunpack.c.h.b16 %v1164
    %v1670 = vunpack.c.l.b16 %v1165
    %v1671 = vunpack.c.h.b16 %v1165
    %v1672 = vunpack.c.l.b16 %v1166
    %v1673 = vunpack.c.h.b16 %v1166
    %v1674 = vunpack.c.l.b16 %v1167
    %v1675 = vunpack.c.h.b16 %v1167
    %v1676 = vunpack.c.l.b16 %v1168
    %v1677 = vunpack.c.h.b16 %v1168
    %v1678 = vunpack.c.l.b16 %v1169
    %v1679 = vunpack.c.h.b16 %v1169
    %v1680 = vunpack.c.l.b16 %v1170
    %v1681 = vunpack.c.h.b16 %v1170
    %v1682 = vunpack.c.l.b16 %v1171
    %v1683 = vunpack.c.h.b16 %v1171
    %v1684 = vunpack.c.l.b16 %v1172
    %v1685 = vunpack.c.h.b16 %v1172
    %v1686 = vunpack.c.l.b16 %v1173
    %v1687 = vunpack.c.h.b16 %v1173
    %v1688 = vunpack.c.l.b16 %v1174
    %v1689 = vunpack.c.h.b16 %v1174
    %v1690 = vunpack.c.l.b16 %v1175
    %v1691 = vunpack.c.h.b16 %v1175
    %v1692 = vunpack.c.l.b16 %v1176
    %v1693 = vunpack.c.h.b16 %v1176
    %v1694 = vunpack.c.l.b16 %v1177
    %v1695 = vunpack.c.h.b16 %v1177
    %v1696 = vunpack.c.l.b16 %v1178
    %v1697 = vunpack.c.h.b16 %v1178
    %v1698 = vunpack.c.l.b16 %v1179
    %v1699 = vunpack.c.h.b16 %v1179
    %v1700 = vunpack.c.l.b16 %v1180
    %v1701 = vunpack.c.h.b16 %v1180
    %v1702 = vunpack.c.l.b16 %v1181
    %v1703 = vunpack.c.h.b16 %v1181
    %v1704 = vunpack.c.l.b16 %v1182
    %v1705 = vunpack.c.h.b16 %v1182
    %v1706 = vunpack.c.l.b16 %v1183
    %v1707 = vunpack.c.h.b16 %v1183
    %v1708 = vunpack.c.l.b16 %v1184
    %v1709 = vunpack.c.h.b16 %v1184
    %v1710 = vunpack.c.l.b16 %v1185
    %v1711 = vunpack.c.h.b16 %v1185
    %v1712 = vunpack.c.l.b16 %v1186
    %v1713 = vunpack.c.h.b16 %v1186
    %v1714 = vunpack.c.l.b16 %v1187
    %v1715 = vunpack.c.h.b16 %v1187
    %v1716 = vunpack.c.l.b16 %v1188
    %v1717 = vunpack.c.h.b16 %v1188
    %v1718 = vunpack.c.l.b16 %v1189
    %v1719 = vunpack.c.h.b16 %v1189
    %v1720 = vunpack.c.l.b16 %v1190
    %v1721 = vunpack.c.h.b16 %v1190
    %v1722 = vunpack.c.l.b16 %v1191
    %v1723 = vunpack.c.h.b16 %v1191
    %v1724 = vunpack.c.l.b16 %v1192
    %v1725 = vunpack.c.h.b16 %v1192
    %v1726 = vunpack.c.l.b16 %v1193
    %v1727 = vunpack.c.h.b16 %v1193
    %v1728 = vunpack.c.l.b16 %v1194
    %v1729 = vunpack.c.h.b16 %v1194
    %v1730 = vunpack.c.l.b16 %v1195
    %v1731 = vunpack.c.h.b16 %v1195
    %v1732 = vunpack.c.l.b16 %v1196
    %v1733 = vunpack.c.h.b16 %v1196
    %v1734 = vunpack.c.l.b16 %v1197
    %v1735 = vunpack.c.h.b16 %v1197
    %v1736 = vunpack.c.l.b16 %v1198
    %v1737 = vunpack.c.h.b16 %v1198
    %v1738 = vunpack.c.l.b16 %v1199
    %v1739 = vunpack.c.h.b16 %v1199
    %v1740 = vunpack.c.l.b16 %v1200
    %v1741 = vunpack.c.h.b16 %v1200
    %v1742 = vunpack.c.l.b16 %v1201
    %v1743 = vunpack.c.h.b16 %v1201
    %v1744 = vunpack.c.l.b16 %v1202
    %v1745 = vunpack.c.h.b16 %v1202
    %v1746 = vunpack.c.l.b16 %v1203
    %v1747 = vunpack.c.h.b16 %v1203
    %v1748 = vunpack.c.l.b16 %v1204
    %v1749 = vunpack.c.h.b16 %v1204
    %v1750 = vunpack.c.l.b16 %v1205
    %v1751 = vunpack.c.h.b16 %v1205
    %v1752 = vunpack.c.l.b16 %v1206
    %v1753 = vunpack.c.h.b16 %v1206
    %v1754 = vunpack.c.l.b16 %v1207
    %v1755 = vunpack.c.h.b16 %v1207
    %v1756 = vunpack.c.l.b16 %v1208
    %v1757 = vunpack.c.h.b16 %v1208
    %v1758 = vunpack.c.l.b16 %v1209
    %v1759 = vunpack.c.h.b16 %v1209
    %v1760 = vunpack.c.l.b16 %v1210
    %v1761 = vunpack.c.h.b16 %v1210
    %v1762 = vunpack.c.l.b16 %v1211
    %v1763 = vunpack.c.h.b16 %v1211
    %v1764 = vunpack.c.l.b16 %v1212
    %v1765 = vunpack.c.h.b16 %v1212
    %v1766 = vunpack.c.l.b16 %v1213
    %v1767 = vunpack.c.h.b16 %v1213
    %v1768 = vunpack.c.l.b16 %v1214
    %v1769 = vunpack.c.h.b16 %v1214
    %v1770 = vunpack.c.l.b16 %v1215
    %v1771 = vunpack.c.h.b16 %v1215
    %v1772 = vunpack.c.l.b16 %v1216
    %v1773 = vunpack.c.h.b16 %v1216
    %v1774 = vunpack.c.l.b16 %v1217
    %v1775 = vunpack.c.h.b16 %v1217
    %v1776 = vunpack.c.l.b16 %v1218
    %v1777 = vunpack.c.h.b16 %v1218
    %v1778 = vunpack.c.l.b16 %v1219
    %v1779 = vunpack.c.h.b16 %v1219
    %v1780 = vunpack.c.l.b16 %v1220
    %v1781 = vunpack.c.h.b16 %v1220
    %v1782 = vunpack.c.l.b16 %v1221
    %v1783 = vunpack.c.h.b16 %v1221
    %v1784 = vunpack.c.l.b16 %v1222
    %v1785 = vunpack.c.h.b16 %v1222
    %v1786 = vunpack.c.l.b16 %v1223
    %v1787 = vunpack.c.h.b16 %v1223
    %v1788 = vunpack.c.l.b16 %v1224
    %v1789 = vunpack.c.h.b16 %v1224
    %v1790 = vunpack.c.l.b16 %v1225
    %v1791 = vunpack.c.h.b16 %v1225
    %v1792 = vunpack.c.l.b16 %v1226
    %v1793 = vunpack.c.h.b16 %v1226
    %v1794 = vunpack.c.l.b16 %v1227
    %v1795 = vunpack.c.h.b16 %v1227
    %v1796 = vunpack.c.l.b16 %v1228
    %v1797 = vunpack.c.h.b16 %v1228
    %v1798 = vunpack.c.l.b16 %v1229
    %v1799 = vunpack.c.h.b16 %v1229
    %v1800 = vunpack.c.l.b16 %v1230
    %v1801 = vunpack.c.h.b16 %v1230
    %v1802 = vunpack.c.l.b16 %v1231
    %v1803 = vunpack.c.h.b16 %v1231
    %v1804 = vunpack.c.l.b16 %v1232
    %v1805 = vunpack.c.h.b16 %v1232
    %v1806 = vunpack.c.l.b16 %v1233
    %v1807 = vunpack.c.h.b16 %v1233
    %v1808 = vunpack.c.l.b16 %v1234
    %v1809 = vunpack.c.h.b16 %v1234
    %v1810 = vunpack.c.l.b16 %v1235
    %v1811 = vunpack.c.h.b16 %v1235
    %v1812 = vunpack.c.l.b16 %v1236
    %v1813 = vunpack.c.h.b16 %v1236
    %v1814 = vunpack.c.l.b16 %v1237
    %v1815 = vunpack.c.h.b16 %v1237
    %v1816 = vunpack.c.l.b16 %v1238
    %v1817 = vunpack.c.h.b16 %v1238
    %v1818 = vunpack.c.l.b16 %v1239
    %v1819 = vunpack.c.h.b16 %v1239
    %v1820 = vunpack.c.l.b16 %v1240
    %v1821 = vunpack.c.h.b16 %v1240
    %v1822 = vunpack.c.l.b16 %v1241
    %v1823 = vunpack.c.h.b16 %v1241
    %v1824 = vunpack.c.l.b16 %v1242
    %v1825 = vunpack.c.h.b16 %v1242
    %v1826 = vunpack.c.l.b16 %v1243
    %v1827 = vunpack.c.h.b16 %v1243
    %v1828 = vunpack.c.l.b16 %v1244
    %v1829 = vunpack.c.h.b16 %v1244
    %v1830 = vunpack.c.l.b16 %v1245
    %v1831 = vunpack.c.h.b16 %v1245
    %v1832 = vunpack.c.l.b16 %v1246
    %v1833 = vunpack.c.h.b16 %v1246
    %v1834 = vunpack.c.l.b16 %v1247
    %v1835 = vunpack.c.h.b16 %v1247
    %v1836 = vunpack.c.l.b16 %v1248
    %v1837 = vunpack.c.h.b16 %v1248
    %v1838 = vunpack.c.l.b16 %v1249
    %v1839 = vunpack.c.h.b16 %v1249
    %v1840 = vunpack.c.l.b16 %v1250
    %v1841 = vunpack.c.h.b16 %v1250
    %v1842 = vunpack.c.l.b16 %v1251
    %v1843 = vunpack.c.h.b16 %v1251
    %v1844 = vunpack.c.l.b16 %v1252
    %v1845 = vunpack.c.h.b16 %v1252
    %v1846 = vunpack.c.l.b16 %v1253
    %v1847 = vunpack.c.h.b16 %v1253
    %v1848 = vunpack.c.l.b16 %v1254
    %v1849 = vunpack.c.h.b16 %v1254
    %v1850 = vunpack.c.l.b16 %v1255
    %v1851 = vunpack.c.h.b16 %v1255
    %v1852 = vunpack.c.l.b16 %v1256
    %v1853 = vunpack.c.h.b16 %v1256
    %v1854 = vunpack.c.l.b16 %v1257
    %v1855 = vunpack.c.h.b16 %v1257
    %v1856 = vunpack.c.l.b16 %v1258
    %v1857 = vunpack.c.h.b16 %v1258
    %v1858 = vunpack.c.l.b16 %v1259
    %v1859 = vunpack.c.h.b16 %v1259
    %v1860 = vunpack.c.l.b16 %v1260
    %v1861 = vunpack.c.h.b16 %v1260
    %v1862 = vunpack.c.l.b16 %v1261
    %v1863 = vunpack.c.h.b16 %v1261
    %v1864 = vunpack.c.l.b16 %v1262
    %v1865 = vunpack.c.h.b16 %v1262
    %v1866 = vunpack.c.l.b16 %v1263
    %v1867 = vunpack.c.h.b16 %v1263
    %v1868 = vunpack.c.l.b16 %v1264
    %v1869 = vunpack.c.h.b16 %v1264
    %v1870 = vunpack.c.l.b16 %v1265
    %v1871 = vunpack.c.h.b16 %v1265
    %v1872 = vpack.c.b16 %v1492, %v1488
    %v1873 = vpack.c.b16 %v1493, %v1489
    %v1874 = vpack.c.b16 %v1494, %v1490
    %v1875 = vpack.c.b16 %v1495, %v1491
    %v1876 = vpack.c.b16 %v1500, %v1496
    %v1877 = vpack.c.b16 %v1501, %v1497
    %v1878 = vpack.c.b16 %v1502, %v1498
    %v1879 = vpack.c.b16 %v1503, %v1499
    %v1880 = vpack.c.b16 %v1508, %v1504
    %v1881 = vpack.c.b16 %v1509, %v1505
    %v1882 = vpack.c.b16 %v1510, %v1506
    %v1883 = vpack.c.b16 %v1511, %v1507
    %v1884 = vpack.c.b16 %v1516, %v1512
    %v1885 = vpack.c.b16 %v1517, %v1513
    %v1886 = vpack.c.b16 %v1518, %v1514
    %v1887 = vpack.c.b16 %v1519, %v1515
    %v1888 = vpack.c.b16 %v1524, %v1520
    %v1889 = vpack.c.b16 %v1525, %v1521
    %v1890 = vpack.c.b16 %v1526, %v1522
    %v1891 = vpack.c.b16 %v1527, %v1523
    %v1892 = vpack.c.b16 %v1532, %v1528
    %v1893 = vpack.c.b16 %v1533, %v1529
    %v1894 = vpack.c.b16 %v1534, %v1530
    %v1895 = vpack.c.b16 %v1535, %v1531
    %v1896 = vpack.c.b16 %v1540, %v1536
    %v1897 = vpack.c.b16 %v1541, %v1537
    %v1898 = vpack.c.b16 %v1542, %v1538
    %v1899 = vpack.c.b16 %v1543, %v1539
    %v1900 = vpack.c.b16 %v1548, %v1544
    %v1901 = vpack.c.b16 %v1549, %v1545
    %v1902 = vpack.c.b16 %v1550, %v1546
    %v1903 = vpack.c.b16 %v1551, %v1547
    %v1904 = vpack.c.b16 %v1556, %v1552
    %v1905 = vpack.c.b16 %v1557, %v1553
    %v1906 = vpack.c.b16 %v1558, %v1554
    %v1907 = vpack.c.b16 %v1559, %v1555
    %v1908 = vpack.c.b16 %v1564, %v1560
    %v1909 = vpack.c.b16 %v1565, %v1561
    %v1910 = vpack.c.b16 %v1566, %v1562
    %v1911 = vpack.c.b16 %v1567, %v1563
    %v1912 = vpack.c.b16 %v1572, %v1568
    %v1913 = vpack.c.b16 %v1573, %v1569
    %v1914 = vpack.c.b16 %v1574, %v1570
    %v1915 = vpack.c.b16 %v1575, %v1571
    %v1916 = vpack.c.b16 %v1580, %v1576
    %v1917 = vpack.c.b16 %v1581, %v1577
    %v1918 = vpack.c.b16 %v1582, %v1578
    %v1919 = vpack.c.b16 %v1583, %v1579
    %v1920 = vpack.c.b16 %v1588, %v1584
    %v1921 = vpack.c.b16 %v1589, %v1585
    %v1922 = vpack.c.b16 %v1590, %v1586
    %v1923 = vpack.c.b16 %v1591, %v1587
    %v1924 = vpack.c.b16 %v1596, %v1592
    %v1925 = vpack.c.b16 %v1597, %v1593
    %v1926 = vpack.c.b16 %v1598, %v1594
    %v1927 = vpack.c.b16 %v1599, %v1595
    %v1928 = vpack.c.b16 %v1604, %v1600
    %v1929 = vpack.c.b16 %v1605, %v1601
    %v1930 = vpack.c.b16 %v1606, %v1602
    %v1931 = vpack.c.b16 %v1607, %v1603
    %v1932 = vpack.c.b16 %v1612, %v1608
    %v1933 = vpack.c.b16 %v1613, %v1609
    %v1934 = vpack.c.b16 %v1614, %v1610
    %v1935 = vpack.c.b16 %v1615, %v1611
    %v1936 = vpack.c.b16 %v1620, %v1616
    %v1937 = vpack.c.b16 %v1621, %v1617
    %v1938 = vpack.c.b16 %v1622, %v1618
    %v1939 = vpack.c.b16 %v1623, %v1619
    %v1940 = vpack.c.b16 %v1628, %v1624
    %v1941 = vpack.c.b16 %v1629, %v1625
    %v1942 = vpack.c.b16 %v1630, %v1626
    %v1943 = vpack.c.b16 %v1631, %v1627
    %v1944 = vpack.c.b16 %v1636, %v1632
    %v1945 = vpack.c.b16 %v1637, %v1633
    %v1946 = vpack.c.b16 %v1638, %v1634
    %v1947 = vpack.c.b16 %v1639, %v1635
    %v1948 = vpack.c.b16 %v1644, %v1640
    %v1949 = vpack.c.b16 %v1645, %v1641
    %v1950 = vpack.c.b16 %v1646, %v1642
    %v1951 = vpack.c.b16 %v1647, %v1643
    %v1952 = vpack.c.b16 %v1652, %v1648
    %v1953 = vpack.c.b16 %v1653, %v1649
    %v1954 = vpack.c.b16 %v1654, %v1650
    %v1955 = vpack.c.b16 %v1655, %v1651
    %v1956 = vpack.c.b16 %v1660, %v1656
    %v1957 = vpack.c.b16 %v1661, %v1657
    %v1958 = vpack.c.b16 %v1662, %v1658
    %v1959 = vpack.c.b16 %v1663, %v1659
    %v1960 = vpack.c.b16 %v1668, %v1664
    %v1961 = vpack.c.b16 %v1669, %v1665
    %v1962 = vpack.c.b16 %v1670, %v1666
    %v1963 = vpack.c.b16 %v1671, %v1667
    %v1964 = vpack.c.b16 %v1676, %v1672
    %v1965 = vpack.c.b16 %v1677, %v1673
    %v1966 = vpack.c.b16 %v1678, %v1674
    %v1967 = vpack.c.b16 %v1679, %v1675
    %v1968 = vpack.c.b16 %v1684, %v1680
    %v1969 = vpack.c.b16 %v1685, %v1681
    %v1970 = vpack.c.b16 %v1686, %v1682
    %v1971 = vpack.c.b16 %v1687, %v1683
    %v1972 = vpack.c.b16 %v1692, %v1688
    %v1973 = vpack.c.b16 %v1693, %v1689
    %v1974 = vpack.c.b16 %v1694, %v1690
    %v1975 = vpack.c.b16 %v1695, %v1691
    %v1976 = vpack.c.b16 %v1700, %v1696
    %v1977 = vpack.c.b16 %v1701, %v1697
    %v1978 = vpack.c.b16 %v1702, %v1698
    %v1979 = vpack.c.b16 %v1703, %v1699
    %v1980 = vpack.c.b16 %v1708, %v1704
    %v1981 = vpack.c.b16 %v1709, %v1705
    %v1982 = vpack.c.b16 %v1710, %v1706
    %v1983 = vpack.c.b16 %v1711, %v1707
    %v1984 = vpack.c.b16 %v1716, %v1712
    %v1985 = vpack.c.b16 %v1717, %v1713
    %v1986 = vpack.c.b16 %v1718, %v1714
    %v1987 = vpack.c.b16 %v1719, %v1715
    %v1988 = vpack.c.b16 %v1724, %v1720
    %v1989 = vpack.c.b16 %v1725, %v1721
    %v1990 = vpack.c.b16 %v1726, %v1722
    %v1991 = vpack.c.b16 %v1727, %v1723
    %v1992 = vpack.c.b16 %v1732, %v1728
    %v1993 = vpack.c.b16 %v1733, %v1729
    %v1994 = vpack.c.b16 %v1734, %v1730
    %v1995 = vpack.c.b16 %v1735, %v1731
    %v1996 = vpack.c.b16 %v1740, %v1736
    %v1997 = vpack.c.b16 %v1741, %v1737
    %v1998 = vpack.c.b16 %v1742, %v1738
    %v1999 = vpack.c.b16 %v1743, %v1739
    %v2000 = vpack.c.b16 %v1748, %v1744
    %v2001 = vpack.c.b16 %v1749, %v1745
    %v2002 = vpack.c.b16 %v1750, %v1746
    %v2003 = vpack.c.b16 %v1751, %v1747
    %v2004 = vpack.c.b16 %v1756, %v1752
    %v2005 = vpack.c.b16 %v1757, %v1753
    %v2006 = vpack.c.b16 %v1758, %v1754
    %v2007 = vpack.c.b16 %v1759, %v1755
    %v2008 = vpack.c.b16 %v1764, %v1760
    %v2009 = vpack.c.b16 %v1765, %v1761
    %v2010 = vpack.c.b16 %v1766, %v1762
    %v2011 = vpack.c.b16 %v1767, %v1763
    %v2012 = vpack.c.b16 %v1772, %v1768
    %v2013 = vpack.c.b16 %v1773, %v1769
    %v2014 = vpack.c.b16 %v1774, %v1770
    %v2015 = vpack.c.b16 %v1775, %v1771
    %v2016 = vpack.c.b16 %v1780, %v1776
    %v2017 = vpack.c.b16 %v1781, %v1777
    %v2018 = vpack.c.b16 %v1782, %v1778
    %v2019 = vpack.c.b16 %v1783, %v1779
    %v2020 = vpack.c.b16 %v1788, %v1784
    %v2021 = vpack.c.b16 %v1789, %v1785
    %v2022 = vpack.c.b16 %v1790, %v1786
    %v2023 = vpack.c.b16 %v1791, %v1787
    %v2024 = vpack.c.b16 %v1796, %v1792
    %v2025 = vpack.c.b16 %v1797, %v1793
    %v2026 = vpack.c.b16 %v1798, %v1794
    %v2027 = vpack.c.b16 %v1799, %v1795
    %v2028 = vpack.c.b16 %v1804, %v1800
    %v2029 = vpack.c.b16 %v1805, %v1801
    %v2030 = vpack.c.b16 %v1806, %v1802
    %v2031 = vpack.c.b16 %v1807, %v1803
    %v2032 = vpack.c.b16 %v1812, %v1808
    %v2033 = vpack.c.b16 %v1813, %v1809
    %v2034 = vpack.c.b16 %v1814, %v1810
    %v2035 = vpack.c.b16 %v1815, %v1811
    %v2036 = vpack.c.b16 %v1820, %v1816
    %v2037 = vpack.c.b16 %v1821, %v1817
    %v2038 = vpack.c.b16 %v1822, %v1818
    %v2039 = vpack.c.b16 %v1823, %v1819
    %v2040 = vpack.c.b16 %v1828, %v1824
    %v2041 = vpack.c.b16 %v1829, %v1825
    %v2042 = vpack.c.b16 %v1830, %v1826
    %v2043 = vpack.c.b16 %v1831, %v1827
    %v2044 = vpack.c.b16 %v1836, %v1832
    %v2045 = vpack.c.b16 %v1837, %v1833
    %v2046 = vpack.c.b16 %v1838, %v1834
    %v2047 = vpack.c.b16 %v1839, %v1835
    %v2048 = vpack.c.b16 %v1844, %v1840
    %v2049 = vpack.c.b16 %v1845, %v1841
    %v2050 = vpack.c.b16 %v1846, %v1842
    %v2051 = vpack.c.b16 %v1847, %v1843
    %v2052 = vpack.c.b16 %v1852, %v1848
    %v2053 = vpack.c.b16 %v1853, %v1849
    %v2054 = vpack.c.b16 %v1854, %v1850
    %v2055 = vpack.c.b16 %v1855, %v1851
    %v2056 = vpack.c.b16 %v1860, %v1856
    %v2057 = vpack.c.b16 %v1861, %v1857
    %v2058 = vpack.c.b16 %v1862, %v1858
    %v2059 = vpack.c.b16 %v1863, %v1859
    %v2060 = vpack.c.b16 %v1868, %v1864
    %v2061 = vpack.c.b16 %v1869, %v1865
    %v2062 = vpack.c.b16 %v1870, %v1866
    %v2063 = vpack.c.b16 %v1871, %v1867
    %2256 = vmatprep.subr.bf16.mxu0 %v1901
    %2257 = vmatpush1.bf16.msra.mxu0 %v1900
    %2258 = vmatprep.subr.bf16.mxu0 %v1897
    %2259 = vmatpush1.bf16.msra.mxu0 %v1896
    %2260 = vmatprep.subr.bf16.mxu0 %v1893
    %2261 = vmatpush1.bf16.msra.mxu0 %v1892
    %2262 = vmatprep.subr.bf16.mxu0 %v1889
    %2263 = vmatpush1.bf16.msra.mxu0 %v1888
    %2264 = vmatprep.subr.bf16.mxu0 %v1885
    %2265 = vmatpush1.bf16.msra.mxu0 %v1884
    %2266 = vmatprep.subr.bf16.mxu0 %v1881
    %2267 = vmatpush1.bf16.msra.mxu0 %v1880
    %2268 = vmatprep.subr.bf16.mxu0 %v1877
    %2269 = vmatpush1.bf16.msra.mxu0 %v1876
    %2270 = vmatprep.subr.bf16.mxu0 %v1873
    %2271 = vmatpush1.bf16.msra.mxu0 %v1872
    %2272 = vmatprep.subr.bf16.mxu0 %v1933
    %2273 = vmatpush2.bf16.msra.mxu0 %v1932
    %2274 = vmatprep.subr.bf16.mxu0 %v1929
    %2275 = vmatpush2.bf16.msra.mxu0 %v1928
    %2276 = vmatprep.subr.bf16.mxu0 %v1925
    %2277 = vmatpush2.bf16.msra.mxu0 %v1924
    %2278 = vmatprep.subr.bf16.mxu0 %v1921
    %2279 = vmatpush2.bf16.msra.mxu0 %v1920
    %2280 = vmatprep.subr.bf16.mxu0 %v1917
    %2281 = vmatpush2.bf16.msra.mxu0 %v1916
    %2282 = vmatprep.subr.bf16.mxu0 %v1913
    %2283 = vmatpush2.bf16.msra.mxu0 %v1912
    %2284 = vmatprep.subr.bf16.mxu0 %v1909
    %2285 = vmatpush2.bf16.msra.mxu0 %v1908
    %2286 = vmatprep.subr.bf16.mxu0 %v1905
    %2287 = vmatpush2.bf16.msra.mxu0 %v1904
    %2288 = vmatprep.mubr.bf16.mxu0 %v1285
    %2289 = vmatmul.mubr.bf16.gmra.mxu0 %v1284
    %v2290 = vpop.f32.mrf.mxu0
    %v2291 = vadd.f32 0.0, %v2290
    %v2292 = vpop.f32.mrf.mxu0
    %v2293 = vadd.f32 0.0, %v2292
    %v2294 = vpop.f32.mrf.mxu0
    %v2295 = vadd.f32 0.0, %v2294
    %v2296 = vpop.f32.mrf.mxu0
    %v2297 = vadd.f32 0.0, %v2296
    %2298 = vdwg.mxu0
    %2299 = vmatprep.subr.bf16.mxu0 %v1965
    %2300 = vmatpush1.bf16.msra.mxu0 %v1964
    %2301 = vmatprep.subr.bf16.mxu0 %v1961
    %2302 = vmatpush1.bf16.msra.mxu0 %v1960
    %2303 = vmatprep.subr.bf16.mxu0 %v1957
    %2304 = vmatpush1.bf16.msra.mxu0 %v1956
    %2305 = vmatprep.subr.bf16.mxu0 %v1953
    %2306 = vmatpush1.bf16.msra.mxu0 %v1952
    %2307 = vmatprep.subr.bf16.mxu0 %v1949
    %2308 = vmatpush1.bf16.msra.mxu0 %v1948
    %2309 = vmatprep.subr.bf16.mxu0 %v1945
    %2310 = vmatpush1.bf16.msra.mxu0 %v1944
    %2311 = vmatprep.subr.bf16.mxu0 %v1941
    %2312 = vmatpush1.bf16.msra.mxu0 %v1940
    %2313 = vmatprep.subr.bf16.mxu0 %v1937
    %2314 = vmatpush1.bf16.msra.mxu0 %v1936
    %2315 = vmatprep.subr.bf16.mxu0 %v1997
    %2316 = vmatpush2.bf16.msra.mxu0 %v1996
    %2317 = vmatprep.subr.bf16.mxu0 %v1993
    %2318 = vmatpush2.bf16.msra.mxu0 %v1992
    %2319 = vmatprep.subr.bf16.mxu0 %v1989
    %2320 = vmatpush2.bf16.msra.mxu0 %v1988
    %2321 = vmatprep.subr.bf16.mxu0 %v1985
    %2322 = vmatpush2.bf16.msra.mxu0 %v1984
    %2323 = vmatprep.subr.bf16.mxu0 %v1981
    %2324 = vmatpush2.bf16.msra.mxu0 %v1980
    %2325 = vmatprep.subr.bf16.mxu0 %v1977
    %2326 = vmatpush2.bf16.msra.mxu0 %v1976
    %2327 = vmatprep.subr.bf16.mxu0 %v1973
    %2328 = vmatpush2.bf16.msra.mxu0 %v1972
    %2329 = vmatprep.subr.bf16.mxu0 %v1969
    %2330 = vmatpush2.bf16.msra.mxu0 %v1968
    %2331 = vmatprep.mubr.bf16.mxu0 %v1287
    %2332 = vmatmul.mubr.bf16.gmra.mxu0 %v1286
    %v2333 = vpop.f32.mrf.mxu0
    %v2334 = vadd.f32 %v2291, %v2333
    %v2335 = vpop.f32.mrf.mxu0
    %v2336 = vadd.f32 %v2293, %v2335
    %v2337 = vpop.f32.mrf.mxu0
    %v2338 = vadd.f32 %v2295, %v2337
    %v2339 = vpop.f32.mrf.mxu0
    %v2340 = vadd.f32 %v2297, %v2339
    %2341 = vdwg.mxu0
    %2342 = vmatprep.subr.bf16.mxu0 %v2029
    %2343 = vmatpush1.bf16.msra.mxu0 %v2028
    %2344 = vmatprep.subr.bf16.mxu0 %v2025
    %2345 = vmatpush1.bf16.msra.mxu0 %v2024
    %2346 = vmatprep.subr.bf16.mxu0 %v2021
    %2347 = vmatpush1.bf16.msra.mxu0 %v2020
    %2348 = vmatprep.subr.bf16.mxu0 %v2017
    %2349 = vmatpush1.bf16.msra.mxu0 %v2016
    %2350 = vmatprep.subr.bf16.mxu0 %v2013
    %2351 = vmatpush1.bf16.msra.mxu0 %v2012
    %2352 = vmatprep.subr.bf16.mxu0 %v2009
    %2353 = vmatpush1.bf16.msra.mxu0 %v2008
    %2354 = vmatprep.subr.bf16.mxu0 %v2005
    %2355 = vmatpush1.bf16.msra.mxu0 %v2004
    %2356 = vmatprep.subr.bf16.mxu0 %v2001
    %2357 = vmatpush1.bf16.msra.mxu0 %v2000
    %2358 = vmatprep.subr.bf16.mxu0 %v2061
    %2359 = vmatpush2.bf16.msra.mxu0 %v2060
    %2360 = vmatprep.subr.bf16.mxu0 %v2057
    %2361 = vmatpush2.bf16.msra.mxu0 %v2056
    %2362 = vmatprep.subr.bf16.mxu0 %v2053
    %2363 = vmatpush2.bf16.msra.mxu0 %v2052
    %2364 = vmatprep.subr.bf16.mxu0 %v2049
    %2365 = vmatpush2.bf16.msra.mxu0 %v2048
    %2366 = vmatprep.subr.bf16.mxu0 %v2045
    %2367 = vmatpush2.bf16.msra.mxu0 %v2044
    %2368 = vmatprep.subr.bf16.mxu0 %v2041
    %2369 = vmatpush2.bf16.msra.mxu0 %v2040
    %2370 = vmatprep.subr.bf16.mxu0 %v2037
    %2371 = vmatpush2.bf16.msra.mxu0 %v2036
    %2372 = vmatprep.subr.bf16.mxu0 %v2033
    %2373 = vmatpush2.bf16.msra.mxu0 %v2032
    %2374 = vmatprep.mubr.bf16.mxu0 %v1289
    %2375 = vmatmul.mubr.bf16.gmra.mxu0 %v1288
    %v2376 = vpop.f32.mrf.mxu0
    %v2377 = vadd.f32 %v2334, %v2376
    %v2378 = vpop.f32.mrf.mxu0
    %v2379 = vadd.f32 %v2336, %v2378
    %v2380 = vpop.f32.mrf.mxu0
    %v2381 = vadd.f32 %v2338, %v2380
    %v2382 = vpop.f32.mrf.mxu0
    %v2383 = vadd.f32 %v2340, %v2382
    %2384 = vdwg.mxu0
    %2385 = vmatprep.subr.bf16.mxu0 %v1903
    %2386 = vmatpush1.bf16.msra.mxu0 %v1902
    %2387 = vmatprep.subr.bf16.mxu0 %v1899
    %2388 = vmatpush1.bf16.msra.mxu0 %v1898
    %2389 = vmatprep.subr.bf16.mxu0 %v1895
    %2390 = vmatpush1.bf16.msra.mxu0 %v1894
    %2391 = vmatprep.subr.bf16.mxu0 %v1891
    %2392 = vmatpush1.bf16.msra.mxu0 %v1890
    %2393 = vmatprep.subr.bf16.mxu0 %v1887
    %2394 = vmatpush1.bf16.msra.mxu0 %v1886
    %2395 = vmatprep.subr.bf16.mxu0 %v1883
    %2396 = vmatpush1.bf16.msra.mxu0 %v1882
    %2397 = vmatprep.subr.bf16.mxu0 %v1879
    %2398 = vmatpush1.bf16.msra.mxu0 %v1878
    %2399 = vmatprep.subr.bf16.mxu0 %v1875
    %2400 = vmatpush1.bf16.msra.mxu0 %v1874
    %2401 = vmatprep.subr.bf16.mxu0 %v1935
    %2402 = vmatpush2.bf16.msra.mxu0 %v1934
    %2403 = vmatprep.subr.bf16.mxu0 %v1931
    %2404 = vmatpush2.bf16.msra.mxu0 %v1930
    %2405 = vmatprep.subr.bf16.mxu0 %v1927
    %2406 = vmatpush2.bf16.msra.mxu0 %v1926
    %2407 = vmatprep.subr.bf16.mxu0 %v1923
    %2408 = vmatpush2.bf16.msra.mxu0 %v1922
    %2409 = vmatprep.subr.bf16.mxu0 %v1919
    %2410 = vmatpush2.bf16.msra.mxu0 %v1918
    %2411 = vmatprep.subr.bf16.mxu0 %v1915
    %2412 = vmatpush2.bf16.msra.mxu0 %v1914
    %2413 = vmatprep.subr.bf16.mxu0 %v1911
    %2414 = vmatpush2.bf16.msra.mxu0 %v1910
    %2415 = vmatprep.subr.bf16.mxu0 %v1907
    %2416 = vmatpush2.bf16.msra.mxu0 %v1906
    %2417 = vmatprep.mubr.bf16.mxu0 %v1285
    %2418 = vmatmul.mubr.bf16.gmra.mxu0 %v1284
    %v2419 = vpop.f32.mrf.mxu0
    %v2420 = vadd.f32 0.0, %v2419
    %v2421 = vpop.f32.mrf.mxu0
    %v2422 = vadd.f32 0.0, %v2421
    %v2423 = vpop.f32.mrf.mxu0
    %v2424 = vadd.f32 0.0, %v2423
    %v2425 = vpop.f32.mrf.mxu0
    %v2426 = vadd.f32 0.0, %v2425
    %2427 = vdwg.mxu0
    %2428 = vmatprep.subr.bf16.mxu0 %v1967
    %2429 = vmatpush1.bf16.msra.mxu0 %v1966
    %2430 = vmatprep.subr.bf16.mxu0 %v1963
    %2431 = vmatpush1.bf16.msra.mxu0 %v1962
    %2432 = vmatprep.subr.bf16.mxu0 %v1959
    %2433 = vmatpush1.bf16.msra.mxu0 %v1958
    %2434 = vmatprep.subr.bf16.mxu0 %v1955
    %2435 = vmatpush1.bf16.msra.mxu0 %v1954
    %2436 = vmatprep.subr.bf16.mxu0 %v1951
    %2437 = vmatpush1.bf16.msra.mxu0 %v1950
    %2438 = vmatprep.subr.bf16.mxu0 %v1947
    %2439 = vmatpush1.bf16.msra.mxu0 %v1946
    %2440 = vmatprep.subr.bf16.mxu0 %v1943
    %2441 = vmatpush1.bf16.msra.mxu0 %v1942
    %2442 = vmatprep.subr.bf16.mxu0 %v1939
    %2443 = vmatpush1.bf16.msra.mxu0 %v1938
    %2444 = vmatprep.subr.bf16.mxu0 %v1999
    %2445 = vmatpush2.bf16.msra.mxu0 %v1998
    %2446 = vmatprep.subr.bf16.mxu0 %v1995
    %2447 = vmatpush2.bf16.msra.mxu0 %v1994
    %2448 = vmatprep.subr.bf16.mxu0 %v1991
    %2449 = vmatpush2.bf16.msra.mxu0 %v1990
    %2450 = vmatprep.subr.bf16.mxu0 %v1987
    %2451 = vmatpush2.bf16.msra.mxu0 %v1986
    %2452 = vmatprep.subr.bf16.mxu0 %v1983
    %2453 = vmatpush2.bf16.msra.mxu0 %v1982
    %2454 = vmatprep.subr.bf16.mxu0 %v1979
    %2455 = vmatpush2.bf16.msra.mxu0 %v1978
    %2456 = vmatprep.subr.bf16.mxu0 %v1975
    %2457 = vmatpush2.bf16.msra.mxu0 %v1974
    %2458 = vmatprep.subr.bf16.mxu0 %v1971
    %2459 = vmatpush2.bf16.msra.mxu0 %v1970
    %2460 = vmatprep.mubr.bf16.mxu0 %v1287
    %2461 = vmatmul.mubr.bf16.gmra.mxu0 %v1286
    %v2462 = vpop.f32.mrf.mxu0
    %v2463 = vadd.f32 %v2420, %v2462
    %v2464 = vpop.f32.mrf.mxu0
    %v2465 = vadd.f32 %v2422, %v2464
    %v2466 = vpop.f32.mrf.mxu0
    %v2467 = vadd.f32 %v2424, %v2466
    %v2468 = vpop.f32.mrf.mxu0
    %v2469 = vadd.f32 %v2426, %v2468
    %2470 = vdwg.mxu0
    %2471 = vmatprep.subr.bf16.mxu0 %v2031
    %2472 = vmatpush1.bf16.msra.mxu0 %v2030
    %2473 = vmatprep.subr.bf16.mxu0 %v2027
    %2474 = vmatpush1.bf16.msra.mxu0 %v2026
    %2475 = vmatprep.subr.bf16.mxu0 %v2023
    %2476 = vmatpush1.bf16.msra.mxu0 %v2022
    %2477 = vmatprep.subr.bf16.mxu0 %v2019
    %2478 = vmatpush1.bf16.msra.mxu0 %v2018
    %2479 = vmatprep.subr.bf16.mxu0 %v2015
    %2480 = vmatpush1.bf16.msra.mxu0 %v2014
    %2481 = vmatprep.subr.bf16.mxu0 %v2011
    %2482 = vmatpush1.bf16.msra.mxu0 %v2010
    %2483 = vmatprep.subr.bf16.mxu0 %v2007
    %2484 = vmatpush1.bf16.msra.mxu0 %v2006
    %2485 = vmatprep.subr.bf16.mxu0 %v2003
    %2486 = vmatpush1.bf16.msra.mxu0 %v2002
    %2487 = vmatprep.subr.bf16.mxu0 %v2063
    %2488 = vmatpush2.bf16.msra.mxu0 %v2062
    %2489 = vmatprep.subr.bf16.mxu0 %v2059
    %2490 = vmatpush2.bf16.msra.mxu0 %v2058
    %2491 = vmatprep.subr.bf16.mxu0 %v2055
    %2492 = vmatpush2.bf16.msra.mxu0 %v2054
    %2493 = vmatprep.subr.bf16.mxu0 %v2051
    %2494 = vmatpush2.bf16.msra.mxu0 %v2050
    %2495 = vmatprep.subr.bf16.mxu0 %v2047
    %2496 = vmatpush2.bf16.msra.mxu0 %v2046
    %2497 = vmatprep.subr.bf16.mxu0 %v2043
    %2498 = vmatpush2.bf16.msra.mxu0 %v2042
    %2499 = vmatprep.subr.bf16.mxu0 %v2039
    %2500 = vmatpush2.bf16.msra.mxu0 %v2038
    %2501 = vmatprep.subr.bf16.mxu0 %v2035
    %2502 = vmatpush2.bf16.msra.mxu0 %v2034
    %2503 = vmatprep.mubr.bf16.mxu0 %v1289
    %2504 = vmatmul.mubr.bf16.gmra.mxu0 %v1288
    %v2505 = vpop.f32.mrf.mxu0
    %v2506 = vadd.f32 %v2463, %v2505
    %v2507 = vpop.f32.mrf.mxu0
    %v2508 = vadd.f32 %v2465, %v2507
    %v2509 = vpop.f32.mrf.mxu0
    %v2510 = vadd.f32 %v2467, %v2509
    %v2511 = vpop.f32.mrf.mxu0
    %v2512 = vadd.f32 %v2469, %v2511
    %2513 = vdwg.mxu0
    %v2514 = vpack.c.bf16 %v2381, %v2377
    %v2515 = vpack.c.bf16 %v2383, %v2379
    %v2516 = vpack.c.bf16 %v2510, %v2506
    %v2517 = vpack.c.bf16 %v2512, %v2508
    %v2522 = vunpack.c.l.b16 %v2514
    %v2523 = vunpack.c.l.b16 %v2515
    %v2524 = vunpack.c.l.b16 %v2516
    %v2525 = vunpack.c.l.b16 %v2517
    %v2526 = vunpack.c.h.b16 %v2514
    %v2527 = vunpack.c.h.b16 %v2515
    %v2528 = vunpack.c.h.b16 %v2516
    %v2529 = vunpack.c.h.b16 %v2517
    %v2530 = vpack.c.b16 %v2523, %v2522
    %v2531 = vpack.c.b16 %v2525, %v2524
    %v2532 = vpack.c.b16 %v2527, %v2526
    %v2533 = vpack.c.b16 %v2529, %v2528
    %2538 = vst [vmem:[#allocation11] sm:$0xff] %v2530
    %2539 = vst [vmem:[#allocation11 + $0x8] sm:$0xff] %v2531
    %2540 = vst [vmem:[#allocation11 + $0x10] sm:$0xff] %v2532
    %2541 = vst [vmem:[#allocation11 + $0x18] sm:$0xff] %v2533
    // Predicated region
    $region34: #{tpu_custom_call.1} parent=1 // pred_check
      _
    $region35: #{tpu_custom_call.1} parent=1 // pred_check_branch
      %2543 = sbr.rel (0) target = $region37
    $region36: #{tpu_custom_call.1} parent=1 // pred_region
      %s2545 = ssub.s32 512, 512
      %2546 = vsyncadd [#allocation4], %s2545
      %s2547 = sshll.u32 [#allocation10], 4
      %s2548 = int_to_ptr.vmem [resolvable:$true] %s2547
      %2553 = dma.vmem_to_hbm [thread:$0]  %s2548, 512, %s4, [#allocation4], 256, 256, 16
    $region37: #{tpu_custom_call.1} parent=1 // pred_fallthru
      _
    // Predicated region
    $region38: #{tpu_custom_call.1} parent=1 // pred_check
      _
    $region39: #{tpu_custom_call.1} parent=1 // pred_check_branch
      %2555 = sbr.rel (0) target = $region41
    $region40: #{tpu_custom_call.1} parent=1 // pred_region
      %s2557 = ssub.s32 512, 512
      %2558 = vsyncadd [#allocation12], %s2557
      %s2559 = sshll.u32 [#allocation11], 4
      %s2560 = int_to_ptr.vmem [resolvable:$true] %s2559
      %2565 = dma.vmem_to_hbm [thread:$0]  %s2560, 512, %s5, [#allocation12], 256, 256, 16
    $region41: #{tpu_custom_call.1} parent=1 // pred_fallthru
      _
    // Predicated region
    $region42: #{tpu_custom_call.1} parent=1 // pred_check
      _
    $region43: #{tpu_custom_call.1} parent=1 // pred_check_branch
      %2567 = sbr.rel (0) target = $region45
    $region44: #{tpu_custom_call.1} parent=1 // pred_region
      %2568 = dma.done [#allocation4], 512
    $region45: #{tpu_custom_call.1} parent=1 // pred_fallthru
      _
    // Predicated region
    $region46: #{tpu_custom_call.1} parent=1 // pred_check
      _
    $region47: #{tpu_custom_call.1} parent=1 // pred_check_branch
      %2570 = sbr.rel (0) target = $region49
    $region48: #{tpu_custom_call.1} parent=1 // pred_region
      %2571 = dma.done [#allocation12], 512
    $region49: #{tpu_custom_call.1} parent=1 // pred_fallthru
      _
    %2572 = vsyncpa [#allocation3], 1
    %2573 = vsyncpa [#allocation6], 1
    %2574 = vsyncpa [#allocation9], 1
    %2575 = vsyncpa [#allocation4], 1
    %2576 = vsyncpa [#allocation12], 1

</llo_original>
